<compile_context>
chip_gen: v7x
topology: tpu7x:2x2x1
jax: 0.10.0
libtpu: 0.0.40
codegen_flags: <defaults>
</compile_context>

<pallas_src>
import jax
import jax.numpy as jnp
import numpy as np
from jax import lax
from jax.experimental import pallas as pl
from jax.experimental.pallas import tpu as pltpu

I = 3   # input size
H = 3   # hidden size
T = 8   # sequence length
B = 1   # batch size (matches hidden = (1, 1, 3) in the PyTorch snippet)


def lstm_kernel(x_ref, h0_ref, c0_ref, wih_ref, whh_ref, b_ref,
                y_ref, yh_ref, yc_ref):
    seq_len, _, in_sz = x_ref.shape
    hid = h0_ref.shape[-1]

    wih = wih_ref[...]             # (I, 4H)
    whh = whh_ref[...]             # (H, 4H)
    bias = b_ref[...]              # (1, 4H)

    # Hoisted loop invariants: weight rows for the VPU broadcast-mul-add
    # formulation, and the lane mask selecting the tanh ("g") gate.
    wih_rows = [wih[k:k + 1, :] for k in range(in_sz)]
    whh_rows = [whh[k:k + 1, :] for k in range(hid)]
    lane = lax.broadcasted_iota(jnp.int32, (1, 4 * hid), 1)
    is_g_lane = (lane >= 2 * hid) & (lane < 3 * hid)

    h = h0_ref[0]                  # (B, H) carried in registers
    c = c0_ref[0]                  # (B, H)

    # Fully unrolled recurrence (static trip count): no per-step grid
    # overhead, no per-step DMA, no VMEM round-trip of the carry.
    for t in range(seq_len):
        x_t = x_ref[t]             # (B, I)

        # gates = x_t @ W_ih^T + h @ W_hh^T + (b_ih + b_hh)   -> (B, 4H)
        # computed as 6 unrolled broadcast-multiply-adds on the VPU.
        g = bias
        for k in range(in_sz):
            g = g + x_t[:, k:k + 1] * wih_rows[k]
        for k in range(hid):
            g = g + h[:, k:k + 1] * whh_rows[k]

        # One full-width sigmoid + one full-width tanh, then a lane select
        # (PyTorch gate ordering: i, f, g, o -- only the "g" gate uses tanh).
        act = jnp.where(is_g_lane, jnp.tanh(g), jax.nn.sigmoid(g))
        i_g = act[:, 0 * hid:1 * hid]
        f_g = act[:, 1 * hid:2 * hid]
        g_g = act[:, 2 * hid:3 * hid]
        o_g = act[:, 3 * hid:4 * hid]

        c = f_g * c + i_g * g_g
        h = o_g * jnp.tanh(c)

        # Store into the resident (T, B, H) output block (single HBM
        # writeback at the end of the one-and-only grid step).
        y_ref[t] = h.astype(y_ref.dtype)

    yh_ref[0] = h.astype(yh_ref.dtype)
    yc_ref[0] = c.astype(yc_ref.dtype)


def simple_lstm_pallas(x, hidden, w_ih, w_hh, b_ih, b_hh):
    """Pallas-backed equivalent of SimpleLSTM.forward(x, hidden)."""
    h0, c0 = hidden
    seq_len, batch, in_sz = x.shape
    hid = h0.shape[-1]

    w_ih_t = jnp.transpose(w_ih)               # (I, 4H)
    w_hh_t = jnp.transpose(w_hh)               # (H, 4H)
    bias = (b_ih + b_hh)[None, :]              # (1, 4H)

    out_shapes = (
        jax.ShapeDtypeStruct((seq_len, batch, hid), x.dtype),   # Y
        jax.ShapeDtypeStruct((1, batch, hid), x.dtype),         # Y_h
        jax.ShapeDtypeStruct((1, batch, hid), x.dtype),         # Y_c
    )

    itemsize = jnp.dtype(x.dtype).itemsize
    cost = pl.CostEstimate(
        flops=2 * seq_len * batch * (in_sz + hid) * 4 * hid,
        transcendentals=seq_len * batch * (2 * 4 * hid + hid),
        bytes_accessed=itemsize * (x.size + h0.size + c0.size
                                   + w_ih.size + w_hh.size + 4 * hid
                                   + seq_len * batch * hid + 2 * batch * hid),
    )

    y, y_h, y_c = pl.pallas_call(
        lstm_kernel,
        out_shape=out_shapes,
        grid=(1,),                                              # single invocation
        in_specs=[
            pl.BlockSpec((seq_len, batch, in_sz), lambda i: (0, 0, 0)),  # x (whole seq)
            pl.BlockSpec((1, batch, hid), lambda i: (0, 0, 0)),          # h0
            pl.BlockSpec((1, batch, hid), lambda i: (0, 0, 0)),          # c0
            pl.BlockSpec((in_sz, 4 * hid), lambda i: (0, 0)),            # W_ih^T
            pl.BlockSpec((hid, 4 * hid), lambda i: (0, 0)),              # W_hh^T
            pl.BlockSpec((1, 4 * hid), lambda i: (0, 0)),                # bias
        ],
        out_specs=(
            pl.BlockSpec((seq_len, batch, hid), lambda i: (0, 0, 0)),    # Y (lane-dense once)
            pl.BlockSpec((1, batch, hid), lambda i: (0, 0, 0)),          # Y_h
            pl.BlockSpec((1, batch, hid), lambda i: (0, 0, 0)),          # Y_c
        ),
        compiler_params=pltpu.CompilerParams(
            dimension_semantics=("arbitrary",),
        ),
        cost_estimate=cost,
    )(x, h0, c0, w_ih_t, w_hh_t, bias)

    return y, (y_h, y_c)


def simple_lstm_ref(x, hidden, w_ih, w_hh, b_ih, b_hh):
    """Pure-JAX reference with identical (PyTorch nn.LSTM) semantics."""
    h0, c0 = hidden
    hid = h0.shape[-1]

    def step(carry, x_t):
        h, c = carry
        gates = x_t @ w_ih.T + b_ih + h @ w_hh.T + b_hh
        i_g = jax.nn.sigmoid(gates[:, 0 * hid:1 * hid])
        f_g = jax.nn.sigmoid(gates[:, 1 * hid:2 * hid])
        g_g = jnp.tanh(gates[:, 2 * hid:3 * hid])
        o_g = jax.nn.sigmoid(gates[:, 3 * hid:4 * hid])
        c = f_g * c + i_g * g_g
        h = o_g * jnp.tanh(c)
        return (h, c), h

    (h_fin, c_fin), ys = jax.lax.scan(step, (h0[0], c0[0]), x)
    return ys, (h_fin[None], c_fin[None])


if __name__ == "__main__":
    key = jax.random.PRNGKey(0)
    k_x, k_h, k_c, k_wih, k_whh, k_bih, k_bhh = jax.random.split(key, 7)

    # Deterministic synthetic parameters (shapes from nn.LSTM(3, 3)).
    scale = 1.0 / np.sqrt(H)
    w_ih = jax.random.uniform(k_wih, (4 * H, I), jnp.float32, -scale, scale)
    w_hh = jax.random.uniform(k_whh, (4 * H, H), jnp.float32, -scale, scale)
    b_ih = jax.random.uniform(k_bih, (4 * H,), jnp.float32, -scale, scale)
    b_hh = jax.random.uniform(k_bhh, (4 * H,), jnp.float32, -scale, scale)

    x = jax.random.normal(k_x, (T, B, I), jnp.float32)
    h0 = jax.random.normal(k_h, (1, B, H), jnp.float32)
    c0 = jax.random.normal(k_c, (1, B, H), jnp.float32)

    y, (y_h, y_c) = simple_lstm_pallas(x, (h0, c0), w_ih, w_hh, b_ih, b_hh)
    jax.block_until_ready((y, y_h, y_c))

    y_ref, (yh_ref, yc_ref) = simple_lstm_ref(x, (h0, c0), w_ih, w_hh, b_ih, b_hh)

    np.testing.assert_allclose(np.asarray(y), np.asarray(y_ref), rtol=1e-5, atol=1e-5)
    np.testing.assert_allclose(np.asarray(y_h), np.asarray(yh_ref), rtol=1e-5, atol=1e-5)
    np.testing.assert_allclose(np.asarray(y_c), np.asarray(yc_ref), rtol=1e-5, atol=1e-5)

    print("KERNEL_OK")
</pallas_src>

<mosaic_0001>
module attributes {stable_mosaic.version = 11 : i64} {
  func.func @lstm_kernel(%arg0: i32, %arg1: memref<8x1x3xf32, #tpu.memory_space<vmem>>, %arg2: memref<1x1x3xf32, #tpu.memory_space<vmem>>, %arg3: memref<1x1x3xf32, #tpu.memory_space<vmem>>, %arg4: memref<3x12xf32, #tpu.memory_space<vmem>>, %arg5: memref<3x12xf32, #tpu.memory_space<vmem>>, %arg6: memref<1x12xf32, #tpu.memory_space<vmem>>, %arg7: memref<8x1x3xf32, #tpu.memory_space<vmem>>, %arg8: memref<1x1x3xf32, #tpu.memory_space<vmem>>, %arg9: memref<1x1x3xf32, #tpu.memory_space<vmem>>) attributes {dimension_semantics = [#tpu.dimension_semantics<arbitrary>], iteration_bounds = array<i64: 1>, scalar_prefetch = 0 : i64, scratch_operands = 0 : i64, tpu.core_type = #tpu.core_type<tc>, window_params = [{pipeline_mode = #tpu.pipeline_mode<synchronous>, transform_indices = @transform_0, window_bounds = array<i64: 8, 1, 3>}, {pipeline_mode = #tpu.pipeline_mode<synchronous>, transform_indices = @transform_1, window_bounds = array<i64: 1, 1, 3>}, {pipeline_mode = #tpu.pipeline_mode<synchronous>, transform_indices = @transform_2, window_bounds = array<i64: 1, 1, 3>}, {pipeline_mode = #tpu.pipeline_mode<synchronous>, transform_indices = @transform_3, window_bounds = array<i64: 3, 12>}, {pipeline_mode = #tpu.pipeline_mode<synchronous>, transform_indices = @transform_4, window_bounds = array<i64: 3, 12>}, {pipeline_mode = #tpu.pipeline_mode<synchronous>, transform_indices = @transform_5, window_bounds = array<i64: 1, 12>}, {pipeline_mode = #tpu.pipeline_mode<synchronous>, transform_indices = @transform_6, window_bounds = array<i64: 8, 1, 3>}, {pipeline_mode = #tpu.pipeline_mode<synchronous>, transform_indices = @transform_7, window_bounds = array<i64: 1, 1, 3>}, {pipeline_mode = #tpu.pipeline_mode<synchronous>, transform_indices = @transform_8, window_bounds = array<i64: 1, 1, 3>}]} {
    %c0 = arith.constant 0 : index
    %c0_0 = arith.constant 0 : index
    %0 = vector.load %arg4[%c0, %c0_0] : memref<3x12xf32, #tpu.memory_space<vmem>>, vector<3x12xf32>
    %c0_1 = arith.constant 0 : index
    %c0_2 = arith.constant 0 : index
    %1 = vector.load %arg5[%c0_1, %c0_2] : memref<3x12xf32, #tpu.memory_space<vmem>>, vector<3x12xf32>
    %c0_3 = arith.constant 0 : index
    %c0_4 = arith.constant 0 : index
    %2 = vector.load %arg6[%c0_3, %c0_4] : memref<1x12xf32, #tpu.memory_space<vmem>>, vector<1x12xf32>
    %3 = vector.extract_strided_slice %0 {offsets = [0, 0], sizes = [1, 12], strides = [1, 1]} : vector<3x12xf32> to vector<1x12xf32>
    %4 = vector.extract_strided_slice %0 {offsets = [1, 0], sizes = [1, 12], strides = [1, 1]} : vector<3x12xf32> to vector<1x12xf32>
    %5 = vector.extract_strided_slice %0 {offsets = [2, 0], sizes = [1, 12], strides = [1, 1]} : vector<3x12xf32> to vector<1x12xf32>
    %6 = vector.extract_strided_slice %1 {offsets = [0, 0], sizes = [1, 12], strides = [1, 1]} : vector<3x12xf32> to vector<1x12xf32>
    %7 = vector.extract_strided_slice %1 {offsets = [1, 0], sizes = [1, 12], strides = [1, 1]} : vector<3x12xf32> to vector<1x12xf32>
    %8 = vector.extract_strided_slice %1 {offsets = [2, 0], sizes = [1, 12], strides = [1, 1]} : vector<3x12xf32> to vector<1x12xf32>
    %9 = tpu.iota {dimensions = array<i32: 1>} : vector<1x12xi32>
    %c6_i32 = arith.constant 6 : i32
    %10 = vector.broadcast %c6_i32 : i32 to vector<1x12xi32>
    %11 = arith.cmpi sge, %9, %10 : vector<1x12xi32>
    %c9_i32 = arith.constant 9 : i32
    %12 = vector.broadcast %c9_i32 : i32 to vector<1x12xi32>
    %13 = arith.cmpi slt, %9, %12 : vector<1x12xi32>
    %14 = arith.andi %11, %13 : vector<1x12xi1>
    %c0_5 = arith.constant 0 : index
    %c0_6 = arith.constant 0 : index
    %c0_7 = arith.constant 0 : index
    %15 = vector.load %arg2[%c0_5, %c0_6, %c0_7] : memref<1x1x3xf32, #tpu.memory_space<vmem>>, vector<1x1x3xf32>
    %16 = vector.shape_cast %15 : vector<1x1x3xf32> to vector<1x3xf32>
    %c0_8 = arith.constant 0 : index
    %c0_9 = arith.constant 0 : index
    %c0_10 = arith.constant 0 : index
    %17 = vector.load %arg3[%c0_8, %c0_9, %c0_10] : memref<1x1x3xf32, #tpu.memory_space<vmem>>, vector<1x1x3xf32>
    %18 = vector.shape_cast %17 : vector<1x1x3xf32> to vector<1x3xf32>
    %c0_11 = arith.constant 0 : index
    %c0_12 = arith.constant 0 : index
    %c0_13 = arith.constant 0 : index
    %19 = vector.load %arg1[%c0_11, %c0_12, %c0_13] : memref<8x1x3xf32, #tpu.memory_space<vmem>>, vector<1x1x3xf32>
    %20 = vector.shape_cast %19 : vector<1x1x3xf32> to vector<1x3xf32>
    %21 = vector.extract_strided_slice %20 {offsets = [0, 0], sizes = [1, 1], strides = [1, 1]} : vector<1x3xf32> to vector<1x1xf32>
    %22 = vector.broadcast %21 : vector<1x1xf32> to vector<1x12xf32>
    %23 = arith.mulf %22, %3 : vector<1x12xf32>
    %24 = arith.addf %2, %23 : vector<1x12xf32>
    %25 = vector.extract_strided_slice %20 {offsets = [0, 1], sizes = [1, 1], strides = [1, 1]} : vector<1x3xf32> to vector<1x1xf32>
    %26 = vector.broadcast %25 : vector<1x1xf32> to vector<1x12xf32>
    %27 = arith.mulf %26, %4 : vector<1x12xf32>
    %28 = arith.addf %24, %27 : vector<1x12xf32>
    %29 = vector.extract_strided_slice %20 {offsets = [0, 2], sizes = [1, 1], strides = [1, 1]} : vector<1x3xf32> to vector<1x1xf32>
    %30 = vector.broadcast %29 : vector<1x1xf32> to vector<1x12xf32>
    %31 = arith.mulf %30, %5 : vector<1x12xf32>
    %32 = arith.addf %28, %31 : vector<1x12xf32>
    %33 = vector.extract_strided_slice %16 {offsets = [0, 0], sizes = [1, 1], strides = [1, 1]} : vector<1x3xf32> to vector<1x1xf32>
    %34 = vector.broadcast %33 : vector<1x1xf32> to vector<1x12xf32>
    %35 = arith.mulf %34, %6 : vector<1x12xf32>
    %36 = arith.addf %32, %35 : vector<1x12xf32>
    %37 = vector.extract_strided_slice %16 {offsets = [0, 1], sizes = [1, 1], strides = [1, 1]} : vector<1x3xf32> to vector<1x1xf32>
    %38 = vector.broadcast %37 : vector<1x1xf32> to vector<1x12xf32>
    %39 = arith.mulf %38, %7 : vector<1x12xf32>
    %40 = arith.addf %36, %39 : vector<1x12xf32>
    %41 = vector.extract_strided_slice %16 {offsets = [0, 2], sizes = [1, 1], strides = [1, 1]} : vector<1x3xf32> to vector<1x1xf32>
    %42 = vector.broadcast %41 : vector<1x1xf32> to vector<1x12xf32>
    %43 = arith.mulf %42, %8 : vector<1x12xf32>
    %44 = arith.addf %40, %43 : vector<1x12xf32>
    %45 = math.tanh %44 : vector<1x12xf32>
    %46 = arith.negf %44 : vector<1x12xf32>
    %47 = math.exp %46 : vector<1x12xf32>
    %cst = arith.constant 1.000000e+00 : f32
    %48 = vector.broadcast %cst : f32 to vector<1x12xf32>
    %49 = arith.addf %48, %47 : vector<1x12xf32>
    %50 = arith.divf %48, %49 : vector<1x12xf32>
    %51 = arith.select %14, %45, %50 : vector<1x12xi1>, vector<1x12xf32>
    %52 = vector.extract_strided_slice %51 {offsets = [0, 0], sizes = [1, 3], strides = [1, 1]} : vector<1x12xf32> to vector<1x3xf32>
    %53 = vector.extract_strided_slice %51 {offsets = [0, 3], sizes = [1, 3], strides = [1, 1]} : vector<1x12xf32> to vector<1x3xf32>
    %54 = vector.extract_strided_slice %51 {offsets = [0, 6], sizes = [1, 3], strides = [1, 1]} : vector<1x12xf32> to vector<1x3xf32>
    %55 = vector.extract_strided_slice %51 {offsets = [0, 9], sizes = [1, 3], strides = [1, 1]} : vector<1x12xf32> to vector<1x3xf32>
    %56 = arith.mulf %53, %18 : vector<1x3xf32>
    %57 = arith.mulf %52, %54 : vector<1x3xf32>
    %58 = arith.addf %56, %57 : vector<1x3xf32>
    %59 = math.tanh %58 : vector<1x3xf32>
    %60 = arith.mulf %55, %59 : vector<1x3xf32>
    %c0_14 = arith.constant 0 : index
    %c0_15 = arith.constant 0 : index
    %c0_16 = arith.constant 0 : index
    %61 = vector.load %arg7[%c0_14, %c0_15, %c0_16] : memref<8x1x3xf32, #tpu.memory_space<vmem>>, vector<1x1x3xf32>
    %62 = vector.shape_cast %61 : vector<1x1x3xf32> to vector<1x3xf32>
    %63 = vector.shape_cast %60 : vector<1x3xf32> to vector<1x1x3xf32>
    tpu.vector_store %arg7[%c0_14, %c0_15, %c0_16], %63 {strides = array<i32>} : memref<8x1x3xf32, #tpu.memory_space<vmem>>, vector<1x1x3xf32>,
    %c1 = arith.constant 1 : index
    %c0_17 = arith.constant 0 : index
    %c0_18 = arith.constant 0 : index
    %64 = vector.load %arg1[%c1, %c0_17, %c0_18] : memref<8x1x3xf32, #tpu.memory_space<vmem>>, vector<1x1x3xf32>
    %65 = vector.shape_cast %64 : vector<1x1x3xf32> to vector<1x3xf32>
    %66 = vector.extract_strided_slice %65 {offsets = [0, 0], sizes = [1, 1], strides = [1, 1]} : vector<1x3xf32> to vector<1x1xf32>
    %67 = vector.broadcast %66 : vector<1x1xf32> to vector<1x12xf32>
    %68 = arith.mulf %67, %3 : vector<1x12xf32>
    %69 = arith.addf %2, %68 : vector<1x12xf32>
    %70 = vector.extract_strided_slice %65 {offsets = [0, 1], sizes = [1, 1], strides = [1, 1]} : vector<1x3xf32> to vector<1x1xf32>
    %71 = vector.broadcast %70 : vector<1x1xf32> to vector<1x12xf32>
    %72 = arith.mulf %71, %4 : vector<1x12xf32>
    %73 = arith.addf %69, %72 : vector<1x12xf32>
    %74 = vector.extract_strided_slice %65 {offsets = [0, 2], sizes = [1, 1], strides = [1, 1]} : vector<1x3xf32> to vector<1x1xf32>
    %75 = vector.broadcast %74 : vector<1x1xf32> to vector<1x12xf32>
    %76 = arith.mulf %75, %5 : vector<1x12xf32>
    %77 = arith.addf %73, %76 : vector<1x12xf32>
    %78 = vector.extract_strided_slice %60 {offsets = [0, 0], sizes = [1, 1], strides = [1, 1]} : vector<1x3xf32> to vector<1x1xf32>
    %79 = vector.broadcast %78 : vector<1x1xf32> to vector<1x12xf32>
    %80 = arith.mulf %79, %6 : vector<1x12xf32>
    %81 = arith.addf %77, %80 : vector<1x12xf32>
    %82 = vector.extract_strided_slice %60 {offsets = [0, 1], sizes = [1, 1], strides = [1, 1]} : vector<1x3xf32> to vector<1x1xf32>
    %83 = vector.broadcast %82 : vector<1x1xf32> to vector<1x12xf32>
    %84 = arith.mulf %83, %7 : vector<1x12xf32>
    %85 = arith.addf %81, %84 : vector<1x12xf32>
    %86 = vector.extract_strided_slice %60 {offsets = [0, 2], sizes = [1, 1], strides = [1, 1]} : vector<1x3xf32> to vector<1x1xf32>
    %87 = vector.broadcast %86 : vector<1x1xf32> to vector<1x12xf32>
    %88 = arith.mulf %87, %8 : vector<1x12xf32>
    %89 = arith.addf %85, %88 : vector<1x12xf32>
    %90 = math.tanh %89 : vector<1x12xf32>
    %91 = arith.negf %89 : vector<1x12xf32>
    %92 = math.exp %91 : vector<1x12xf32>
    %cst_19 = arith.constant 1.000000e+00 : f32
    %93 = vector.broadcast %cst_19 : f32 to vector<1x12xf32>
    %94 = arith.addf %93, %92 : vector<1x12xf32>
    %95 = arith.divf %93, %94 : vector<1x12xf32>
    %96 = arith.select %14, %90, %95 : vector<1x12xi1>, vector<1x12xf32>
    %97 = vector.extract_strided_slice %96 {offsets = [0, 0], sizes = [1, 3], strides = [1, 1]} : vector<1x12xf32> to vector<1x3xf32>
    %98 = vector.extract_strided_slice %96 {offsets = [0, 3], sizes = [1, 3], strides = [1, 1]} : vector<1x12xf32> to vector<1x3xf32>
    %99 = vector.extract_strided_slice %96 {offsets = [0, 6], sizes = [1, 3], strides = [1, 1]} : vector<1x12xf32> to vector<1x3xf32>
    %100 = vector.extract_strided_slice %96 {offsets = [0, 9], sizes = [1, 3], strides = [1, 1]} : vector<1x12xf32> to vector<1x3xf32>
    %101 = arith.mulf %98, %58 : vector<1x3xf32>
    %102 = arith.mulf %97, %99 : vector<1x3xf32>
    %103 = arith.addf %101, %102 : vector<1x3xf32>
    %104 = math.tanh %103 : vector<1x3xf32>
    %105 = arith.mulf %100, %104 : vector<1x3xf32>
    %c1_20 = arith.constant 1 : index
    %c0_21 = arith.constant 0 : index
    %c0_22 = arith.constant 0 : index
    %106 = vector.load %arg7[%c1_20, %c0_21, %c0_22] : memref<8x1x3xf32, #tpu.memory_space<vmem>>, vector<1x1x3xf32>
    %107 = vector.shape_cast %106 : vector<1x1x3xf32> to vector<1x3xf32>
    %108 = vector.shape_cast %105 : vector<1x3xf32> to vector<1x1x3xf32>
    tpu.vector_store %arg7[%c1_20, %c0_21, %c0_22], %108 {strides = array<i32>} : memref<8x1x3xf32, #tpu.memory_space<vmem>>, vector<1x1x3xf32>,
    %c2 = arith.constant 2 : index
    %c0_23 = arith.constant 0 : index
    %c0_24 = arith.constant 0 : index
    %109 = vector.load %arg1[%c2, %c0_23, %c0_24] : memref<8x1x3xf32, #tpu.memory_space<vmem>>, vector<1x1x3xf32>
    %110 = vector.shape_cast %109 : vector<1x1x3xf32> to vector<1x3xf32>
    %111 = vector.extract_strided_slice %110 {offsets = [0, 0], sizes = [1, 1], strides = [1, 1]} : vector<1x3xf32> to vector<1x1xf32>
    %112 = vector.broadcast %111 : vector<1x1xf32> to vector<1x12xf32>
    %113 = arith.mulf %112, %3 : vector<1x12xf32>
    %114 = arith.addf %2, %113 : vector<1x12xf32>
    %115 = vector.extract_strided_slice %110 {offsets = [0, 1], sizes = [1, 1], strides = [1, 1]} : vector<1x3xf32> to vector<1x1xf32>
    %116 = vector.broadcast %115 : vector<1x1xf32> to vector<1x12xf32>
    %117 = arith.mulf %116, %4 : vector<1x12xf32>
    %118 = arith.addf %114, %117 : vector<1x12xf32>
    %119 = vector.extract_strided_slice %110 {offsets = [0, 2], sizes = [1, 1], strides = [1, 1]} : vector<1x3xf32> to vector<1x1xf32>
    %120 = vector.broadcast %119 : vector<1x1xf32> to vector<1x12xf32>
    %121 = arith.mulf %120, %5 : vector<1x12xf32>
    %122 = arith.addf %118, %121 : vector<1x12xf32>
    %123 = vector.extract_strided_slice %105 {offsets = [0, 0], sizes = [1, 1], strides = [1, 1]} : vector<1x3xf32> to vector<1x1xf32>
    %124 = vector.broadcast %123 : vector<1x1xf32> to vector<1x12xf32>
    %125 = arith.mulf %124, %6 : vector<1x12xf32>
    %126 = arith.addf %122, %125 : vector<1x12xf32>
    %127 = vector.extract_strided_slice %105 {offsets = [0, 1], sizes = [1, 1], strides = [1, 1]} : vector<1x3xf32> to vector<1x1xf32>
    %128 = vector.broadcast %127 : vector<1x1xf32> to vector<1x12xf32>
    %129 = arith.mulf %128, %7 : vector<1x12xf32>
    %130 = arith.addf %126, %129 : vector<1x12xf32>
    %131 = vector.extract_strided_slice %105 {offsets = [0, 2], sizes = [1, 1], strides = [1, 1]} : vector<1x3xf32> to vector<1x1xf32>
    %132 = vector.broadcast %131 : vector<1x1xf32> to vector<1x12xf32>
    %133 = arith.mulf %132, %8 : vector<1x12xf32>
    %134 = arith.addf %130, %133 : vector<1x12xf32>
    %135 = math.tanh %134 : vector<1x12xf32>
    %136 = arith.negf %134 : vector<1x12xf32>
    %137 = math.exp %136 : vector<1x12xf32>
    %cst_25 = arith.constant 1.000000e+00 : f32
    %138 = vector.broadcast %cst_25 : f32 to vector<1x12xf32>
    %139 = arith.addf %138, %137 : vector<1x12xf32>
    %140 = arith.divf %138, %139 : vector<1x12xf32>
    %141 = arith.select %14, %135, %140 : vector<1x12xi1>, vector<1x12xf32>
    %142 = vector.extract_strided_slice %141 {offsets = [0, 0], sizes = [1, 3], strides = [1, 1]} : vector<1x12xf32> to vector<1x3xf32>
    %143 = vector.extract_strided_slice %141 {offsets = [0, 3], sizes = [1, 3], strides = [1, 1]} : vector<1x12xf32> to vector<1x3xf32>
    %144 = vector.extract_strided_slice %141 {offsets = [0, 6], sizes = [1, 3], strides = [1, 1]} : vector<1x12xf32> to vector<1x3xf32>
    %145 = vector.extract_strided_slice %141 {offsets = [0, 9], sizes = [1, 3], strides = [1, 1]} : vector<1x12xf32> to vector<1x3xf32>
    %146 = arith.mulf %143, %103 : vector<1x3xf32>
    %147 = arith.mulf %142, %144 : vector<1x3xf32>
    %148 = arith.addf %146, %147 : vector<1x3xf32>
    %149 = math.tanh %148 : vector<1x3xf32>
    %150 = arith.mulf %145, %149 : vector<1x3xf32>
    %c2_26 = arith.constant 2 : index
    %c0_27 = arith.constant 0 : index
    %c0_28 = arith.constant 0 : index
    %151 = vector.load %arg7[%c2_26, %c0_27, %c0_28] : memref<8x1x3xf32, #tpu.memory_space<vmem>>, vector<1x1x3xf32>
    %152 = vector.shape_cast %151 : vector<1x1x3xf32> to vector<1x3xf32>
    %153 = vector.shape_cast %150 : vector<1x3xf32> to vector<1x1x3xf32>
    tpu.vector_store %arg7[%c2_26, %c0_27, %c0_28], %153 {strides = array<i32>} : memref<8x1x3xf32, #tpu.memory_space<vmem>>, vector<1x1x3xf32>,
    %c3 = arith.constant 3 : index
    %c0_29 = arith.constant 0 : index
    %c0_30 = arith.constant 0 : index
    %154 = vector.load %arg1[%c3, %c0_29, %c0_30] : memref<8x1x3xf32, #tpu.memory_space<vmem>>, vector<1x1x3xf32>
    %155 = vector.shape_cast %154 : vector<1x1x3xf32> to vector<1x3xf32>
    %156 = vector.extract_strided_slice %155 {offsets = [0, 0], sizes = [1, 1], strides = [1, 1]} : vector<1x3xf32> to vector<1x1xf32>
    %157 = vector.broadcast %156 : vector<1x1xf32> to vector<1x12xf32>
    %158 = arith.mulf %157, %3 : vector<1x12xf32>
    %159 = arith.addf %2, %158 : vector<1x12xf32>
    %160 = vector.extract_strided_slice %155 {offsets = [0, 1], sizes = [1, 1], strides = [1, 1]} : vector<1x3xf32> to vector<1x1xf32>
    %161 = vector.broadcast %160 : vector<1x1xf32> to vector<1x12xf32>
    %162 = arith.mulf %161, %4 : vector<1x12xf32>
    %163 = arith.addf %159, %162 : vector<1x12xf32>
    %164 = vector.extract_strided_slice %155 {offsets = [0, 2], sizes = [1, 1], strides = [1, 1]} : vector<1x3xf32> to vector<1x1xf32>
    %165 = vector.broadcast %164 : vector<1x1xf32> to vector<1x12xf32>
    %166 = arith.mulf %165, %5 : vector<1x12xf32>
    %167 = arith.addf %163, %166 : vector<1x12xf32>
    %168 = vector.extract_strided_slice %150 {offsets = [0, 0], sizes = [1, 1], strides = [1, 1]} : vector<1x3xf32> to vector<1x1xf32>
    %169 = vector.broadcast %168 : vector<1x1xf32> to vector<1x12xf32>
    %170 = arith.mulf %169, %6 : vector<1x12xf32>
    %171 = arith.addf %167, %170 : vector<1x12xf32>
    %172 = vector.extract_strided_slice %150 {offsets = [0, 1], sizes = [1, 1], strides = [1, 1]} : vector<1x3xf32> to vector<1x1xf32>
    %173 = vector.broadcast %172 : vector<1x1xf32> to vector<1x12xf32>
    %174 = arith.mulf %173, %7 : vector<1x12xf32>
    %175 = arith.addf %171, %174 : vector<1x12xf32>
    %176 = vector.extract_strided_slice %150 {offsets = [0, 2], sizes = [1, 1], strides = [1, 1]} : vector<1x3xf32> to vector<1x1xf32>
    %177 = vector.broadcast %176 : vector<1x1xf32> to vector<1x12xf32>
    %178 = arith.mulf %177, %8 : vector<1x12xf32>
    %179 = arith.addf %175, %178 : vector<1x12xf32>
    %180 = math.tanh %179 : vector<1x12xf32>
    %181 = arith.negf %179 : vector<1x12xf32>
    %182 = math.exp %181 : vector<1x12xf32>
    %cst_31 = arith.constant 1.000000e+00 : f32
    %183 = vector.broadcast %cst_31 : f32 to vector<1x12xf32>
    %184 = arith.addf %183, %182 : vector<1x12xf32>
    %185 = arith.divf %183, %184 : vector<1x12xf32>
    %186 = arith.select %14, %180, %185 : vector<1x12xi1>, vector<1x12xf32>
    %187 = vector.extract_strided_slice %186 {offsets = [0, 0], sizes = [1, 3], strides = [1, 1]} : vector<1x12xf32> to vector<1x3xf32>
    %188 = vector.extract_strided_slice %186 {offsets = [0, 3], sizes = [1, 3], strides = [1, 1]} : vector<1x12xf32> to vector<1x3xf32>
    %189 = vector.extract_strided_slice %186 {offsets = [0, 6], sizes = [1, 3], strides = [1, 1]} : vector<1x12xf32> to vector<1x3xf32>
    %190 = vector.extract_strided_slice %186 {offsets = [0, 9], sizes = [1, 3], strides = [1, 1]} : vector<1x12xf32> to vector<1x3xf32>
    %191 = arith.mulf %188, %148 : vector<1x3xf32>
    %192 = arith.mulf %187, %189 : vector<1x3xf32>
    %193 = arith.addf %191, %192 : vector<1x3xf32>
    %194 = math.tanh %193 : vector<1x3xf32>
    %195 = arith.mulf %190, %194 : vector<1x3xf32>
    %c3_32 = arith.constant 3 : index
    %c0_33 = arith.constant 0 : index
    %c0_34 = arith.constant 0 : index
    %196 = vector.load %arg7[%c3_32, %c0_33, %c0_34] : memref<8x1x3xf32, #tpu.memory_space<vmem>>, vector<1x1x3xf32>
    %197 = vector.shape_cast %196 : vector<1x1x3xf32> to vector<1x3xf32>
    %198 = vector.shape_cast %195 : vector<1x3xf32> to vector<1x1x3xf32>
    tpu.vector_store %arg7[%c3_32, %c0_33, %c0_34], %198 {strides = array<i32>} : memref<8x1x3xf32, #tpu.memory_space<vmem>>, vector<1x1x3xf32>,
    %c4 = arith.constant 4 : index
    %c0_35 = arith.constant 0 : index
    %c0_36 = arith.constant 0 : index
    %199 = vector.load %arg1[%c4, %c0_35, %c0_36] : memref<8x1x3xf32, #tpu.memory_space<vmem>>, vector<1x1x3xf32>
    %200 = vector.shape_cast %199 : vector<1x1x3xf32> to vector<1x3xf32>
    %201 = vector.extract_strided_slice %200 {offsets = [0, 0], sizes = [1, 1], strides = [1, 1]} : vector<1x3xf32> to vector<1x1xf32>
    %202 = vector.broadcast %201 : vector<1x1xf32> to vector<1x12xf32>
    %203 = arith.mulf %202, %3 : vector<1x12xf32>
    %204 = arith.addf %2, %203 : vector<1x12xf32>
    %205 = vector.extract_strided_slice %200 {offsets = [0, 1], sizes = [1, 1], strides = [1, 1]} : vector<1x3xf32> to vector<1x1xf32>
    %206 = vector.broadcast %205 : vector<1x1xf32> to vector<1x12xf32>
    %207 = arith.mulf %206, %4 : vector<1x12xf32>
    %208 = arith.addf %204, %207 : vector<1x12xf32>
    %209 = vector.extract_strided_slice %200 {offsets = [0, 2], sizes = [1, 1], strides = [1, 1]} : vector<1x3xf32> to vector<1x1xf32>
    %210 = vector.broadcast %209 : vector<1x1xf32> to vector<1x12xf32>
    %211 = arith.mulf %210, %5 : vector<1x12xf32>
    %212 = arith.addf %208, %211 : vector<1x12xf32>
    %213 = vector.extract_strided_slice %195 {offsets = [0, 0], sizes = [1, 1], strides = [1, 1]} : vector<1x3xf32> to vector<1x1xf32>
    %214 = vector.broadcast %213 : vector<1x1xf32> to vector<1x12xf32>
    %215 = arith.mulf %214, %6 : vector<1x12xf32>
    %216 = arith.addf %212, %215 : vector<1x12xf32>
    %217 = vector.extract_strided_slice %195 {offsets = [0, 1], sizes = [1, 1], strides = [1, 1]} : vector<1x3xf32> to vector<1x1xf32>
    %218 = vector.broadcast %217 : vector<1x1xf32> to vector<1x12xf32>
    %219 = arith.mulf %218, %7 : vector<1x12xf32>
    %220 = arith.addf %216, %219 : vector<1x12xf32>
    %221 = vector.extract_strided_slice %195 {offsets = [0, 2], sizes = [1, 1], strides = [1, 1]} : vector<1x3xf32> to vector<1x1xf32>
    %222 = vector.broadcast %221 : vector<1x1xf32> to vector<1x12xf32>
    %223 = arith.mulf %222, %8 : vector<1x12xf32>
    %224 = arith.addf %220, %223 : vector<1x12xf32>
    %225 = math.tanh %224 : vector<1x12xf32>
    %226 = arith.negf %224 : vector<1x12xf32>
    %227 = math.exp %226 : vector<1x12xf32>
    %cst_37 = arith.constant 1.000000e+00 : f32
    %228 = vector.broadcast %cst_37 : f32 to vector<1x12xf32>
    %229 = arith.addf %228, %227 : vector<1x12xf32>
    %230 = arith.divf %228, %229 : vector<1x12xf32>
    %231 = arith.select %14, %225, %230 : vector<1x12xi1>, vector<1x12xf32>
    %232 = vector.extract_strided_slice %231 {offsets = [0, 0], sizes = [1, 3], strides = [1, 1]} : vector<1x12xf32> to vector<1x3xf32>
    %233 = vector.extract_strided_slice %231 {offsets = [0, 3], sizes = [1, 3], strides = [1, 1]} : vector<1x12xf32> to vector<1x3xf32>
    %234 = vector.extract_strided_slice %231 {offsets = [0, 6], sizes = [1, 3], strides = [1, 1]} : vector<1x12xf32> to vector<1x3xf32>
    %235 = vector.extract_strided_slice %231 {offsets = [0, 9], sizes = [1, 3], strides = [1, 1]} : vector<1x12xf32> to vector<1x3xf32>
    %236 = arith.mulf %233, %193 : vector<1x3xf32>
    %237 = arith.mulf %232, %234 : vector<1x3xf32>
    %238 = arith.addf %236, %237 : vector<1x3xf32>
    %239 = math.tanh %238 : vector<1x3xf32>
    %240 = arith.mulf %235, %239 : vector<1x3xf32>
    %c4_38 = arith.constant 4 : index
    %c0_39 = arith.constant 0 : index
    %c0_40 = arith.constant 0 : index
    %241 = vector.load %arg7[%c4_38, %c0_39, %c0_40] : memref<8x1x3xf32, #tpu.memory_space<vmem>>, vector<1x1x3xf32>
    %242 = vector.shape_cast %241 : vector<1x1x3xf32> to vector<1x3xf32>
    %243 = vector.shape_cast %240 : vector<1x3xf32> to vector<1x1x3xf32>
    tpu.vector_store %arg7[%c4_38, %c0_39, %c0_40], %243 {strides = array<i32>} : memref<8x1x3xf32, #tpu.memory_space<vmem>>, vector<1x1x3xf32>,
    %c5 = arith.constant 5 : index
    %c0_41 = arith.constant 0 : index
    %c0_42 = arith.constant 0 : index
    %244 = vector.load %arg1[%c5, %c0_41, %c0_42] : memref<8x1x3xf32, #tpu.memory_space<vmem>>, vector<1x1x3xf32>
    %245 = vector.shape_cast %244 : vector<1x1x3xf32> to vector<1x3xf32>
    %246 = vector.extract_strided_slice %245 {offsets = [0, 0], sizes = [1, 1], strides = [1, 1]} : vector<1x3xf32> to vector<1x1xf32>
    %247 = vector.broadcast %246 : vector<1x1xf32> to vector<1x12xf32>
    %248 = arith.mulf %247, %3 : vector<1x12xf32>
    %249 = arith.addf %2, %248 : vector<1x12xf32>
    %250 = vector.extract_strided_slice %245 {offsets = [0, 1], sizes = [1, 1], strides = [1, 1]} : vector<1x3xf32> to vector<1x1xf32>
    %251 = vector.broadcast %250 : vector<1x1xf32> to vector<1x12xf32>
    %252 = arith.mulf %251, %4 : vector<1x12xf32>
    %253 = arith.addf %249, %252 : vector<1x12xf32>
    %254 = vector.extract_strided_slice %245 {offsets = [0, 2], sizes = [1, 1], strides = [1, 1]} : vector<1x3xf32> to vector<1x1xf32>
    %255 = vector.broadcast %254 : vector<1x1xf32> to vector<1x12xf32>
    %256 = arith.mulf %255, %5 : vector<1x12xf32>
    %257 = arith.addf %253, %256 : vector<1x12xf32>
    %258 = vector.extract_strided_slice %240 {offsets = [0, 0], sizes = [1, 1], strides = [1, 1]} : vector<1x3xf32> to vector<1x1xf32>
    %259 = vector.broadcast %258 : vector<1x1xf32> to vector<1x12xf32>
    %260 = arith.mulf %259, %6 : vector<1x12xf32>
    %261 = arith.addf %257, %260 : vector<1x12xf32>
    %262 = vector.extract_strided_slice %240 {offsets = [0, 1], sizes = [1, 1], strides = [1, 1]} : vector<1x3xf32> to vector<1x1xf32>
    %263 = vector.broadcast %262 : vector<1x1xf32> to vector<1x12xf32>
    %264 = arith.mulf %263, %7 : vector<1x12xf32>
    %265 = arith.addf %261, %264 : vector<1x12xf32>
    %266 = vector.extract_strided_slice %240 {offsets = [0, 2], sizes = [1, 1], strides = [1, 1]} : vector<1x3xf32> to vector<1x1xf32>
    %267 = vector.broadcast %266 : vector<1x1xf32> to vector<1x12xf32>
    %268 = arith.mulf %267, %8 : vector<1x12xf32>
    %269 = arith.addf %265, %268 : vector<1x12xf32>
    %270 = math.tanh %269 : vector<1x12xf32>
    %271 = arith.negf %269 : vector<1x12xf32>
    %272 = math.exp %271 : vector<1x12xf32>
    %cst_43 = arith.constant 1.000000e+00 : f32
    %273 = vector.broadcast %cst_43 : f32 to vector<1x12xf32>
    %274 = arith.addf %273, %272 : vector<1x12xf32>
    %275 = arith.divf %273, %274 : vector<1x12xf32>
    %276 = arith.select %14, %270, %275 : vector<1x12xi1>, vector<1x12xf32>
    %277 = vector.extract_strided_slice %276 {offsets = [0, 0], sizes = [1, 3], strides = [1, 1]} : vector<1x12xf32> to vector<1x3xf32>
    %278 = vector.extract_strided_slice %276 {offsets = [0, 3], sizes = [1, 3], strides = [1, 1]} : vector<1x12xf32> to vector<1x3xf32>
    %279 = vector.extract_strided_slice %276 {offsets = [0, 6], sizes = [1, 3], strides = [1, 1]} : vector<1x12xf32> to vector<1x3xf32>
    %280 = vector.extract_strided_slice %276 {offsets = [0, 9], sizes = [1, 3], strides = [1, 1]} : vector<1x12xf32> to vector<1x3xf32>
    %281 = arith.mulf %278, %238 : vector<1x3xf32>
    %282 = arith.mulf %277, %279 : vector<1x3xf32>
    %283 = arith.addf %281, %282 : vector<1x3xf32>
    %284 = math.tanh %283 : vector<1x3xf32>
    %285 = arith.mulf %280, %284 : vector<1x3xf32>
    %c5_44 = arith.constant 5 : index
    %c0_45 = arith.constant 0 : index
    %c0_46 = arith.constant 0 : index
    %286 = vector.load %arg7[%c5_44, %c0_45, %c0_46] : memref<8x1x3xf32, #tpu.memory_space<vmem>>, vector<1x1x3xf32>
    %287 = vector.shape_cast %286 : vector<1x1x3xf32> to vector<1x3xf32>
    %288 = vector.shape_cast %285 : vector<1x3xf32> to vector<1x1x3xf32>
    tpu.vector_store %arg7[%c5_44, %c0_45, %c0_46], %288 {strides = array<i32>} : memref<8x1x3xf32, #tpu.memory_space<vmem>>, vector<1x1x3xf32>,
    %c6 = arith.constant 6 : index
    %c0_47 = arith.constant 0 : index
    %c0_48 = arith.constant 0 : index
    %289 = vector.load %arg1[%c6, %c0_47, %c0_48] : memref<8x1x3xf32, #tpu.memory_space<vmem>>, vector<1x1x3xf32>
    %290 = vector.shape_cast %289 : vector<1x1x3xf32> to vector<1x3xf32>
    %291 = vector.extract_strided_slice %290 {offsets = [0, 0], sizes = [1, 1], strides = [1, 1]} : vector<1x3xf32> to vector<1x1xf32>
    %292 = vector.broadcast %291 : vector<1x1xf32> to vector<1x12xf32>
    %293 = arith.mulf %292, %3 : vector<1x12xf32>
    %294 = arith.addf %2, %293 : vector<1x12xf32>
    %295 = vector.extract_strided_slice %290 {offsets = [0, 1], sizes = [1, 1], strides = [1, 1]} : vector<1x3xf32> to vector<1x1xf32>
    %296 = vector.broadcast %295 : vector<1x1xf32> to vector<1x12xf32>
    %297 = arith.mulf %296, %4 : vector<1x12xf32>
    %298 = arith.addf %294, %297 : vector<1x12xf32>
    %299 = vector.extract_strided_slice %290 {offsets = [0, 2], sizes = [1, 1], strides = [1, 1]} : vector<1x3xf32> to vector<1x1xf32>
    %300 = vector.broadcast %299 : vector<1x1xf32> to vector<1x12xf32>
    %301 = arith.mulf %300, %5 : vector<1x12xf32>
    %302 = arith.addf %298, %301 : vector<1x12xf32>
    %303 = vector.extract_strided_slice %285 {offsets = [0, 0], sizes = [1, 1], strides = [1, 1]} : vector<1x3xf32> to vector<1x1xf32>
    %304 = vector.broadcast %303 : vector<1x1xf32> to vector<1x12xf32>
    %305 = arith.mulf %304, %6 : vector<1x12xf32>
    %306 = arith.addf %302, %305 : vector<1x12xf32>
    %307 = vector.extract_strided_slice %285 {offsets = [0, 1], sizes = [1, 1], strides = [1, 1]} : vector<1x3xf32> to vector<1x1xf32>
    %308 = vector.broadcast %307 : vector<1x1xf32> to vector<1x12xf32>
    %309 = arith.mulf %308, %7 : vector<1x12xf32>
    %310 = arith.addf %306, %309 : vector<1x12xf32>
    %311 = vector.extract_strided_slice %285 {offsets = [0, 2], sizes = [1, 1], strides = [1, 1]} : vector<1x3xf32> to vector<1x1xf32>
    %312 = vector.broadcast %311 : vector<1x1xf32> to vector<1x12xf32>
    %313 = arith.mulf %312, %8 : vector<1x12xf32>
    %314 = arith.addf %310, %313 : vector<1x12xf32>
    %315 = math.tanh %314 : vector<1x12xf32>
    %316 = arith.negf %314 : vector<1x12xf32>
    %317 = math.exp %316 : vector<1x12xf32>
    %cst_49 = arith.constant 1.000000e+00 : f32
    %318 = vector.broadcast %cst_49 : f32 to vector<1x12xf32>
    %319 = arith.addf %318, %317 : vector<1x12xf32>
    %320 = arith.divf %318, %319 : vector<1x12xf32>
    %321 = arith.select %14, %315, %320 : vector<1x12xi1>, vector<1x12xf32>
    %322 = vector.extract_strided_slice %321 {offsets = [0, 0], sizes = [1, 3], strides = [1, 1]} : vector<1x12xf32> to vector<1x3xf32>
    %323 = vector.extract_strided_slice %321 {offsets = [0, 3], sizes = [1, 3], strides = [1, 1]} : vector<1x12xf32> to vector<1x3xf32>
    %324 = vector.extract_strided_slice %321 {offsets = [0, 6], sizes = [1, 3], strides = [1, 1]} : vector<1x12xf32> to vector<1x3xf32>
    %325 = vector.extract_strided_slice %321 {offsets = [0, 9], sizes = [1, 3], strides = [1, 1]} : vector<1x12xf32> to vector<1x3xf32>
    %326 = arith.mulf %323, %283 : vector<1x3xf32>
    %327 = arith.mulf %322, %324 : vector<1x3xf32>
    %328 = arith.addf %326, %327 : vector<1x3xf32>
    %329 = math.tanh %328 : vector<1x3xf32>
    %330 = arith.mulf %325, %329 : vector<1x3xf32>
    %c6_50 = arith.constant 6 : index
    %c0_51 = arith.constant 0 : index
    %c0_52 = arith.constant 0 : index
    %331 = vector.load %arg7[%c6_50, %c0_51, %c0_52] : memref<8x1x3xf32, #tpu.memory_space<vmem>>, vector<1x1x3xf32>
    %332 = vector.shape_cast %331 : vector<1x1x3xf32> to vector<1x3xf32>
    %333 = vector.shape_cast %330 : vector<1x3xf32> to vector<1x1x3xf32>
    tpu.vector_store %arg7[%c6_50, %c0_51, %c0_52], %333 {strides = array<i32>} : memref<8x1x3xf32, #tpu.memory_space<vmem>>, vector<1x1x3xf32>,
    %c7 = arith.constant 7 : index
    %c0_53 = arith.constant 0 : index
    %c0_54 = arith.constant 0 : index
    %334 = vector.load %arg1[%c7, %c0_53, %c0_54] : memref<8x1x3xf32, #tpu.memory_space<vmem>>, vector<1x1x3xf32>
    %335 = vector.shape_cast %334 : vector<1x1x3xf32> to vector<1x3xf32>
    %336 = vector.extract_strided_slice %335 {offsets = [0, 0], sizes = [1, 1], strides = [1, 1]} : vector<1x3xf32> to vector<1x1xf32>
    %337 = vector.broadcast %336 : vector<1x1xf32> to vector<1x12xf32>
    %338 = arith.mulf %337, %3 : vector<1x12xf32>
    %339 = arith.addf %2, %338 : vector<1x12xf32>
    %340 = vector.extract_strided_slice %335 {offsets = [0, 1], sizes = [1, 1], strides = [1, 1]} : vector<1x3xf32> to vector<1x1xf32>
    %341 = vector.broadcast %340 : vector<1x1xf32> to vector<1x12xf32>
    %342 = arith.mulf %341, %4 : vector<1x12xf32>
    %343 = arith.addf %339, %342 : vector<1x12xf32>
    %344 = vector.extract_strided_slice %335 {offsets = [0, 2], sizes = [1, 1], strides = [1, 1]} : vector<1x3xf32> to vector<1x1xf32>
    %345 = vector.broadcast %344 : vector<1x1xf32> to vector<1x12xf32>
    %346 = arith.mulf %345, %5 : vector<1x12xf32>
    %347 = arith.addf %343, %346 : vector<1x12xf32>
    %348 = vector.extract_strided_slice %330 {offsets = [0, 0], sizes = [1, 1], strides = [1, 1]} : vector<1x3xf32> to vector<1x1xf32>
    %349 = vector.broadcast %348 : vector<1x1xf32> to vector<1x12xf32>
    %350 = arith.mulf %349, %6 : vector<1x12xf32>
    %351 = arith.addf %347, %350 : vector<1x12xf32>
    %352 = vector.extract_strided_slice %330 {offsets = [0, 1], sizes = [1, 1], strides = [1, 1]} : vector<1x3xf32> to vector<1x1xf32>
    %353 = vector.broadcast %352 : vector<1x1xf32> to vector<1x12xf32>
    %354 = arith.mulf %353, %7 : vector<1x12xf32>
    %355 = arith.addf %351, %354 : vector<1x12xf32>
    %356 = vector.extract_strided_slice %330 {offsets = [0, 2], sizes = [1, 1], strides = [1, 1]} : vector<1x3xf32> to vector<1x1xf32>
    %357 = vector.broadcast %356 : vector<1x1xf32> to vector<1x12xf32>
    %358 = arith.mulf %357, %8 : vector<1x12xf32>
    %359 = arith.addf %355, %358 : vector<1x12xf32>
    %360 = math.tanh %359 : vector<1x12xf32>
    %361 = arith.negf %359 : vector<1x12xf32>
    %362 = math.exp %361 : vector<1x12xf32>
    %cst_55 = arith.constant 1.000000e+00 : f32
    %363 = vector.broadcast %cst_55 : f32 to vector<1x12xf32>
    %364 = arith.addf %363, %362 : vector<1x12xf32>
    %365 = arith.divf %363, %364 : vector<1x12xf32>
    %366 = arith.select %14, %360, %365 : vector<1x12xi1>, vector<1x12xf32>
    %367 = vector.extract_strided_slice %366 {offsets = [0, 0], sizes = [1, 3], strides = [1, 1]} : vector<1x12xf32> to vector<1x3xf32>
    %368 = vector.extract_strided_slice %366 {offsets = [0, 3], sizes = [1, 3], strides = [1, 1]} : vector<1x12xf32> to vector<1x3xf32>
    %369 = vector.extract_strided_slice %366 {offsets = [0, 6], sizes = [1, 3], strides = [1, 1]} : vector<1x12xf32> to vector<1x3xf32>
    %370 = vector.extract_strided_slice %366 {offsets = [0, 9], sizes = [1, 3], strides = [1, 1]} : vector<1x12xf32> to vector<1x3xf32>
    %371 = arith.mulf %368, %328 : vector<1x3xf32>
    %372 = arith.mulf %367, %369 : vector<1x3xf32>
    %373 = arith.addf %371, %372 : vector<1x3xf32>
    %374 = math.tanh %373 : vector<1x3xf32>
    %375 = arith.mulf %370, %374 : vector<1x3xf32>
    %c7_56 = arith.constant 7 : index
    %c0_57 = arith.constant 0 : index
    %c0_58 = arith.constant 0 : index
    %376 = vector.load %arg7[%c7_56, %c0_57, %c0_58] : memref<8x1x3xf32, #tpu.memory_space<vmem>>, vector<1x1x3xf32>
    %377 = vector.shape_cast %376 : vector<1x1x3xf32> to vector<1x3xf32>
    %378 = vector.shape_cast %375 : vector<1x3xf32> to vector<1x1x3xf32>
    tpu.vector_store %arg7[%c7_56, %c0_57, %c0_58], %378 {strides = array<i32>} : memref<8x1x3xf32, #tpu.memory_space<vmem>>, vector<1x1x3xf32>,
    %c0_59 = arith.constant 0 : index
    %c0_60 = arith.constant 0 : index
    %c0_61 = arith.constant 0 : index
    %379 = vector.load %arg8[%c0_59, %c0_60, %c0_61] : memref<1x1x3xf32, #tpu.memory_space<vmem>>, vector<1x1x3xf32>
    %380 = vector.shape_cast %379 : vector<1x1x3xf32> to vector<1x3xf32>
    %381 = vector.shape_cast %375 : vector<1x3xf32> to vector<1x1x3xf32>
    tpu.vector_store %arg8[%c0_59, %c0_60, %c0_61], %381 {strides = array<i32>} : memref<1x1x3xf32, #tpu.memory_space<vmem>>, vector<1x1x3xf32>,
    %c0_62 = arith.constant 0 : index
    %c0_63 = arith.constant 0 : index
    %c0_64 = arith.constant 0 : index
    %382 = vector.load %arg9[%c0_62, %c0_63, %c0_64] : memref<1x1x3xf32, #tpu.memory_space<vmem>>, vector<1x1x3xf32>
    %383 = vector.shape_cast %382 : vector<1x1x3xf32> to vector<1x3xf32>
    %384 = vector.shape_cast %373 : vector<1x3xf32> to vector<1x1x3xf32>
    tpu.vector_store %arg9[%c0_62, %c0_63, %c0_64], %384 {strides = array<i32>} : memref<1x1x3xf32, #tpu.memory_space<vmem>>, vector<1x1x3xf32>,
    return
  }
  func.func @transform_0(%arg0: i32) -> (i32, i32, i32) {
    %c0_i32 = arith.constant 0 : i32
    %c0_i32_0 = arith.constant 0 : i32
    %c0_i32_1 = arith.constant 0 : i32
    %c0_i32_2 = arith.constant 0 : i32
    return %c0_i32, %c0_i32_0, %c0_i32_1 : i32, i32, i32
  }
  func.func @transform_1(%arg0: i32) -> (i32, i32, i32) {
    %c0_i32 = arith.constant 0 : i32
    %c0_i32_0 = arith.constant 0 : i32
    %c0_i32_1 = arith.constant 0 : i32
    %c0_i32_2 = arith.constant 0 : i32
    return %c0_i32, %c0_i32_0, %c0_i32_1 : i32, i32, i32
  }
  func.func @transform_2(%arg0: i32) -> (i32, i32, i32) {
    %c0_i32 = arith.constant 0 : i32
    %c0_i32_0 = arith.constant 0 : i32
    %c0_i32_1 = arith.constant 0 : i32
    %c0_i32_2 = arith.constant 0 : i32
    return %c0_i32, %c0_i32_0, %c0_i32_1 : i32, i32, i32
  }
  func.func @transform_3(%arg0: i32) -> (i32, i32) {
    %c0_i32 = arith.constant 0 : i32
    %c0_i32_0 = arith.constant 0 : i32
    %c0_i32_1 = arith.constant 0 : i32
    return %c0_i32, %c0_i32_0 : i32, i32
  }
  func.func @transform_4(%arg0: i32) -> (i32, i32) {
    %c0_i32 = arith.constant 0 : i32
    %c0_i32_0 = arith.constant 0 : i32
    %c0_i32_1 = arith.constant 0 : i32
    return %c0_i32, %c0_i32_0 : i32, i32
  }
  func.func @transform_5(%arg0: i32) -> (i32, i32) {
    %c0_i32 = arith.constant 0 : i32
    %c0_i32_0 = arith.constant 0 : i32
    %c0_i32_1 = arith.constant 0 : i32
    return %c0_i32, %c0_i32_0 : i32, i32
  }
  func.func @transform_6(%arg0: i32) -> (i32, i32, i32) {
    %c0_i32 = arith.constant 0 : i32
    %c0_i32_0 = arith.constant 0 : i32
    %c0_i32_1 = arith.constant 0 : i32
    %c0_i32_2 = arith.constant 0 : i32
    return %c0_i32, %c0_i32_0, %c0_i32_1 : i32, i32, i32
  }
  func.func @transform_7(%arg0: i32) -> (i32, i32, i32) {
    %c0_i32 = arith.constant 0 : i32
    %c0_i32_0 = arith.constant 0 : i32
    %c0_i32_1 = arith.constant 0 : i32
    %c0_i32_2 = arith.constant 0 : i32
    return %c0_i32, %c0_i32_0, %c0_i32_1 : i32, i32, i32
  }
  func.func @transform_8(%arg0: i32) -> (i32, i32, i32) {
    %c0_i32 = arith.constant 0 : i32
    %c0_i32_0 = arith.constant 0 : i32
    %c0_i32_1 = arith.constant 0 : i32
    %c0_i32_2 = arith.constant 0 : i32
    return %c0_i32, %c0_i32_0, %c0_i32_1 : i32, i32, i32
  }
}

</mosaic_0001>

<llo_original>
// kernel: tpu_custom_call.1
$region0: #{tpu_custom_call.1}
  #allocation0 [shape = 'u32[]', space=smem, size = 0x4, offset = 0x4, fixed_abs, tag = 'smem constant byte address 0x4 - core index']
  #allocation1 [shape = 'u32[144,128]{1,0:T(1,128)}', space=vmem, size = 0x12000, scoped, tag = 'internal scratch']
  %s0 = inlined_call_operand.vmem [shape: f32[8,1,3], index: 0, kind: input, shape index: {}]
  %s1 = inlined_call_operand.vmem [shape: f32[1,1,3], index: 1, kind: input, shape index: {}]
  %s2 = inlined_call_operand.vmem [shape: f32[1,1,3], index: 2, kind: input, shape index: {}]
  %s3 = inlined_call_operand.vmem [shape: f32[3,12], index: 3, kind: input, shape index: {}]
  %s4 = inlined_call_operand.vmem [shape: f32[3,12], index: 4, kind: input, shape index: {}]
  %s5 = inlined_call_operand.vmem [shape: f32[1,12], index: 5, kind: input, shape index: {}]
  %s6 = inlined_call_operand.vmem [shape: f32[8,1,3], index: 6, kind: output, shape index: {0}]
  %s7 = inlined_call_operand.hbm [shape: f32[1,1,3], index: 7, kind: output, shape index: {1}]
  %s8 = inlined_call_operand.hbm [shape: f32[1,1,3], index: 8, kind: output, shape index: {2}]
  %9 = xla_tuple %s6, %s7, %s8
  %s10 = sld [smem:[#allocation0]]
  $region50: #{tpu_custom_call.1} parent=0
    _
  %s12 = ssub.s32 1, %s10
  %s13 = scalar_select 0, %s12, %s10
  $region1: #{tpu_custom_call.1} parent=0
    #allocation2 [shape = 'u8[512]{0}', space=vmem, size = 0x400, scoped, tag = 'output window, operand 1, single buffered']
    #allocation3 [shape = 's32[1]{0}', space=sflag, size = 0x4, scoped, tag = 'scoped memory for tpu_custom_call.1']
    #allocation4 [shape = 'u8[512]{0}', space=vmem, size = 0x400, scoped, tag = 'output window, operand 2, single buffered']
    #allocation5 [shape = 's32[1]{0}', space=sflag, size = 0x4, scoped, tag = 'scoped memory for tpu_custom_call.1']
    %14 = vsyncpa [#allocation3], 0
    %15 = vsyncpa [#allocation5], 0
    // Predicated region
    $region2: #{tpu_custom_call.1} parent=1 // pred_check
      _
    $region3: #{tpu_custom_call.1} parent=1 // pred_check_branch
      %17 = sbr.rel (0) target = $region5
    $region4: #{tpu_custom_call.1} parent=1 // pred_region
      _
    $region5: #{tpu_custom_call.1} parent=1 // pred_fallthru
      _
    // Predicated region
    $region6: #{tpu_custom_call.1} parent=1 // pred_check
      _
    $region7: #{tpu_custom_call.1} parent=1 // pred_check_branch
      %19 = sbr.rel (0) target = $region9
    $region8: #{tpu_custom_call.1} parent=1 // pred_region
      _
    $region9: #{tpu_custom_call.1} parent=1 // pred_fallthru
      _
    // Predicated region
    $region10: #{tpu_custom_call.1} parent=1 // pred_check
      _
    $region11: #{tpu_custom_call.1} parent=1 // pred_check_branch
      %21 = sbr.rel (0) target = $region13
    $region12: #{tpu_custom_call.1} parent=1 // pred_region
      _
    $region13: #{tpu_custom_call.1} parent=1 // pred_fallthru
      _
    // Predicated region
    $region14: #{tpu_custom_call.1} parent=1 // pred_check
      _
    $region15: #{tpu_custom_call.1} parent=1 // pred_check_branch
      %23 = sbr.rel (0) target = $region17
    $region16: #{tpu_custom_call.1} parent=1 // pred_region
      _
    $region17: #{tpu_custom_call.1} parent=1 // pred_fallthru
      _
    // Predicated region
    $region18: #{tpu_custom_call.1} parent=1 // pred_check
      _
    $region19: #{tpu_custom_call.1} parent=1 // pred_check_branch
      %25 = sbr.rel (0) target = $region21
    $region20: #{tpu_custom_call.1} parent=1 // pred_region
      _
    $region21: #{tpu_custom_call.1} parent=1 // pred_fallthru
      _
    // Predicated region
    $region22: #{tpu_custom_call.1} parent=1 // pred_check
      _
    $region23: #{tpu_custom_call.1} parent=1 // pred_check_branch
      %27 = sbr.rel (0) target = $region25
    $region24: #{tpu_custom_call.1} parent=1 // pred_region
      _
    $region25: #{tpu_custom_call.1} parent=1 // pred_fallthru
      _
    %v28 = vld [vmem:[%s3] sm:$0x7]
    %v29 = vld [vmem:[%s4] sm:$0x7]
    %v30 = vld [vmem:[%s5] sm:$0x1]
    %v31 = vlaneseq
    %v32 = vand.u32 %v31, 127
    %vm33 = vcmp.ge.s32.totalorder %v32, 6
    %vm34 = vcmp.lt.s32.totalorder %v32, 9
    %vm35 = vmand %vm33, %vm34
    %v36 = vld [vmem:[%s1] sm:$0x1]
    %v37 = vld [vmem:[%s2] sm:$0x1]
    %v38 = vld [vmem:[%s0] sm:$0x1]
    %40 = vset.pattern.permute.xlu0 0
    %41 = vperm.xlu0 %40, %v38
    %v42 = vpop.permute.xlu0 %41
    %v44 = vlaneseq
    %v45 = vshrl.u32 %v44, 7
    %v46 = vsub.s32 0, %v45
    %v47 = vrot.slane %v42, %v46
    %v48 = vmul.f32 %v47, %v28
    %v49 = vadd.f32 %v30, %v48
    %50 = vset.pattern.permute.xlu0 1
    %51 = vperm.xlu0 %50, %v38
    %v52 = vpop.permute.xlu0 %51
    %v54 = vlaneseq
    %v55 = vshrl.u32 %v54, 7
    %v56 = vsub.s32 0, %v55
    %v57 = vrot.slane %v52, %v56
    %v58 = vmul.f32 %v57, %v28
    %v61 = vunpack.c.l.s4 1966171168
    %v62 = vunpack.c.0.s8 %v61
    %v63 = vlaneseq
    %v64 = vshrl.u32 %v63, 7
    %v65 = vsub.s32 %v62, %v64
    %v66 = vrot.slane %v58, %v65
    %v67 = vcombine.high %v66, %v66
    %v69 = vunpack.c.l.s4 1966171168
    %v70 = vunpack.c.0.s8 %v69
    %v71 = vlaneseq
    %v72 = vshrl.u32 %v71, 7
    %v73 = vsub.s32 %v70, %v72
    %v74 = vrot.slane %v67, %v73
    %v76 = vadd.f32 %v49, %v74
    %77 = vset.pattern.permute.xlu0 2
    %78 = vperm.xlu0 %77, %v38
    %v79 = vpop.permute.xlu0 %78
    %v81 = vlaneseq
    %v82 = vshrl.u32 %v81, 7
    %v83 = vsub.s32 0, %v82
    %v84 = vrot.slane %v79, %v83
    %v85 = vmul.f32 %v84, %v28
    %v88 = vunpack.c.l.s4 1966171168
    %v89 = vunpack.c.0.s8 %v88
    %v90 = vlaneseq
    %v91 = vshrl.u32 %v90, 7
    %v92 = vsub.s32 %v89, %v91
    %v93 = vrot.slane %v85, %v92
    %v95 = vunpack.c.l.s4 1966171168
    %v96 = vunpack.c.0.s8 %v95
    %v97 = vlaneseq
    %v98 = vshrl.u32 %v97, 7
    %v99 = vsub.s32 %v96, %v98
    %v100 = vrot.slane %v93, %v99
    %v101 = vcombine.high %v100, %v100
    %v103 = vadd.f32 %v76, %v101
    %105 = vset.pattern.permute.xlu0 0
    %106 = vperm.xlu0 %105, %v36
    %v107 = vpop.permute.xlu0 %106
    %v109 = vlaneseq
    %v110 = vshrl.u32 %v109, 7
    %v111 = vsub.s32 0, %v110
    %v112 = vrot.slane %v107, %v111
    %v113 = vmul.f32 %v112, %v29
    %v114 = vadd.f32 %v103, %v113
    %115 = vset.pattern.permute.xlu0 1
    %116 = vperm.xlu0 %115, %v36
    %v117 = vpop.permute.xlu0 %116
    %v119 = vlaneseq
    %v120 = vshrl.u32 %v119, 7
    %v121 = vsub.s32 0, %v120
    %v122 = vrot.slane %v117, %v121
    %v123 = vmul.f32 %v122, %v29
    %v126 = vunpack.c.l.s4 1966171168
    %v127 = vunpack.c.0.s8 %v126
    %v128 = vlaneseq
    %v129 = vshrl.u32 %v128, 7
    %v130 = vsub.s32 %v127, %v129
    %v131 = vrot.slane %v123, %v130
    %v132 = vcombine.high %v131, %v131
    %v134 = vunpack.c.l.s4 1966171168
    %v135 = vunpack.c.0.s8 %v134
    %v136 = vlaneseq
    %v137 = vshrl.u32 %v136, 7
    %v138 = vsub.s32 %v135, %v137
    %v139 = vrot.slane %v132, %v138
    %v141 = vadd.f32 %v114, %v139
    %142 = vset.pattern.permute.xlu0 2
    %143 = vperm.xlu0 %142, %v36
    %v144 = vpop.permute.xlu0 %143
    %v146 = vlaneseq
    %v147 = vshrl.u32 %v146, 7
    %v148 = vsub.s32 0, %v147
    %v149 = vrot.slane %v144, %v148
    %v150 = vmul.f32 %v149, %v29
    %v153 = vunpack.c.l.s4 1966171168
    %v154 = vunpack.c.0.s8 %v153
    %v155 = vlaneseq
    %v156 = vshrl.u32 %v155, 7
    %v157 = vsub.s32 %v154, %v156
    %v158 = vrot.slane %v150, %v157
    %v160 = vunpack.c.l.s4 1966171168
    %v161 = vunpack.c.0.s8 %v160
    %v162 = vlaneseq
    %v163 = vshrl.u32 %v162, 7
    %v164 = vsub.s32 %v161, %v163
    %v165 = vrot.slane %v158, %v164
    %v166 = vcombine.high %v165, %v165
    %v168 = vadd.f32 %v141, %v166
    %v169 = vtanh.pop %v168
    %v170 = vxor.u32 %v168, 2147483648
    %v171 = vmul.f32 %v170, 1.442695
    %v172 = vpow.pop %v171
    %v173 = vadd.f32 %v172, 1.0
    %v174 = vrcp.pop %v173
    %v175 = vmul.f32 1.0, %v174
    %v176 = vsel %vm35, %v169, %v175
    %v178 = vlaneseq
    %v179 = vshrl.u32 %v178, 7
    %v180 = vsub.s32 0, %v179
    %v181 = vrot.slane %v37, %v180
    %182 = vrot.lane.b32.xlu0 %v181, 3
    %v183 = vpop.permute.xlu0 %182
    %v185 = vmul.f32 %v176, %v183
    %187 = vrot.lane.b32.xlu0 %v176, 122
    %v188 = vpop.permute.xlu0 %187
    %v190 = vmul.f32 %v176, %v188
    %192 = vrot.lane.b32.xlu0 %v190, 3
    %v193 = vpop.permute.xlu0 %192
    %v195 = vadd.f32 %v185, %v193
    %v196 = vtanh.pop %v195
    %198 = vrot.lane.b32.xlu0 %v196, 6
    %v199 = vpop.permute.xlu0 %198
    %v201 = vmul.f32 %v176, %v199
    %203 = vrot.lane.b32.xlu0 %v201, 119
    %v204 = vpop.permute.xlu0 %203
    %vm206 = vcmask 16384
    %207 = vst.msk [vmem:[%s6] sm:$0x1] %vm206, %v204
    %s208 = scalar_lea.vmem %s0, 1
    %v209 = vld [vmem:[%s208] sm:$0x1]
    %211 = vset.pattern.permute.xlu0 0
    %212 = vperm.xlu0 %211, %v209
    %v213 = vpop.permute.xlu0 %212
    %v215 = vlaneseq
    %v216 = vshrl.u32 %v215, 7
    %v217 = vsub.s32 0, %v216
    %v218 = vrot.slane %v213, %v217
    %v219 = vmul.f32 %v218, %v28
    %v220 = vadd.f32 %v30, %v219
    %221 = vset.pattern.permute.xlu0 1
    %222 = vperm.xlu0 %221, %v209
    %v223 = vpop.permute.xlu0 %222
    %v225 = vlaneseq
    %v226 = vshrl.u32 %v225, 7
    %v227 = vsub.s32 0, %v226
    %v228 = vrot.slane %v223, %v227
    %v229 = vmul.f32 %v228, %v28
    %v232 = vunpack.c.l.s4 1966171168
    %v233 = vunpack.c.0.s8 %v232
    %v234 = vlaneseq
    %v235 = vshrl.u32 %v234, 7
    %v236 = vsub.s32 %v233, %v235
    %v237 = vrot.slane %v229, %v236
    %v238 = vcombine.high %v237, %v237
    %v240 = vunpack.c.l.s4 1966171168
    %v241 = vunpack.c.0.s8 %v240
    %v242 = vlaneseq
    %v243 = vshrl.u32 %v242, 7
    %v244 = vsub.s32 %v241, %v243
    %v245 = vrot.slane %v238, %v244
    %v247 = vadd.f32 %v220, %v245
    %248 = vset.pattern.permute.xlu0 2
    %249 = vperm.xlu0 %248, %v209
    %v250 = vpop.permute.xlu0 %249
    %v252 = vlaneseq
    %v253 = vshrl.u32 %v252, 7
    %v254 = vsub.s32 0, %v253
    %v255 = vrot.slane %v250, %v254
    %v256 = vmul.f32 %v255, %v28
    %v259 = vunpack.c.l.s4 1966171168
    %v260 = vunpack.c.0.s8 %v259
    %v261 = vlaneseq
    %v262 = vshrl.u32 %v261, 7
    %v263 = vsub.s32 %v260, %v262
    %v264 = vrot.slane %v256, %v263
    %v266 = vunpack.c.l.s4 1966171168
    %v267 = vunpack.c.0.s8 %v266
    %v268 = vlaneseq
    %v269 = vshrl.u32 %v268, 7
    %v270 = vsub.s32 %v267, %v269
    %v271 = vrot.slane %v264, %v270
    %v272 = vcombine.high %v271, %v271
    %v274 = vadd.f32 %v247, %v272
    %275 = vset.pattern.permute.xlu0 9
    %276 = vperm.xlu0 %275, %v201
    %v277 = vpop.permute.xlu0 %276
    %v279 = vmul.f32 %v277, %v29
    %v280 = vadd.f32 %v274, %v279
    %281 = vset.pattern.permute.xlu0 10
    %282 = vperm.xlu0 %281, %v201
    %v283 = vpop.permute.xlu0 %282
    %v286 = vrot.slane %v29, 1
    %v288 = vmul.f32 %v283, %v286
    %v289 = vadd.f32 %v280, %v288
    %290 = vset.pattern.permute.xlu0 11
    %291 = vperm.xlu0 %290, %v201
    %v292 = vpop.permute.xlu0 %291
    %v294 = vrot.slane %v29, 2
    %v296 = vmul.f32 %v292, %v294
    %v297 = vadd.f32 %v289, %v296
    %v298 = vtanh.pop %v297
    %v299 = vxor.u32 %v297, 2147483648
    %v300 = vmul.f32 %v299, 1.442695
    %v301 = vpow.pop %v300
    %v302 = vadd.f32 %v301, 1.0
    %v303 = vrcp.pop %v302
    %v304 = vmul.f32 1.0, %v303
    %v305 = vsel %vm35, %v298, %v304
    %v306 = vmul.f32 %v305, %v195
    %308 = vrot.lane.b32.xlu0 %v305, 122
    %v309 = vpop.permute.xlu0 %308
    %v311 = vmul.f32 %v305, %v309
    %313 = vrot.lane.b32.xlu0 %v311, 3
    %v314 = vpop.permute.xlu0 %313
    %v316 = vadd.f32 %v306, %v314
    %v317 = vtanh.pop %v316
    %319 = vrot.lane.b32.xlu0 %v317, 6
    %v320 = vpop.permute.xlu0 %319
    %v322 = vmul.f32 %v305, %v320
    %324 = vrot.lane.b32.xlu0 %v322, 119
    %v325 = vpop.permute.xlu0 %324
    %s327 = scalar_lea.vmem %s6, 1
    %328 = vst.msk [vmem:[%s327] sm:$0x1] %vm206, %v325
    %s329 = scalar_lea.vmem %s0, 2
    %v330 = vld [vmem:[%s329] sm:$0x1]
    %332 = vset.pattern.permute.xlu0 0
    %333 = vperm.xlu0 %332, %v330
    %v334 = vpop.permute.xlu0 %333
    %v336 = vlaneseq
    %v337 = vshrl.u32 %v336, 7
    %v338 = vsub.s32 0, %v337
    %v339 = vrot.slane %v334, %v338
    %v340 = vmul.f32 %v339, %v28
    %v341 = vadd.f32 %v30, %v340
    %342 = vset.pattern.permute.xlu0 1
    %343 = vperm.xlu0 %342, %v330
    %v344 = vpop.permute.xlu0 %343
    %v346 = vlaneseq
    %v347 = vshrl.u32 %v346, 7
    %v348 = vsub.s32 0, %v347
    %v349 = vrot.slane %v344, %v348
    %v350 = vmul.f32 %v349, %v28
    %v353 = vunpack.c.l.s4 1966171168
    %v354 = vunpack.c.0.s8 %v353
    %v355 = vlaneseq
    %v356 = vshrl.u32 %v355, 7
    %v357 = vsub.s32 %v354, %v356
    %v358 = vrot.slane %v350, %v357
    %v359 = vcombine.high %v358, %v358
    %v361 = vunpack.c.l.s4 1966171168
    %v362 = vunpack.c.0.s8 %v361
    %v363 = vlaneseq
    %v364 = vshrl.u32 %v363, 7
    %v365 = vsub.s32 %v362, %v364
    %v366 = vrot.slane %v359, %v365
    %v368 = vadd.f32 %v341, %v366
    %369 = vset.pattern.permute.xlu0 2
    %370 = vperm.xlu0 %369, %v330
    %v371 = vpop.permute.xlu0 %370
    %v373 = vlaneseq
    %v374 = vshrl.u32 %v373, 7
    %v375 = vsub.s32 0, %v374
    %v376 = vrot.slane %v371, %v375
    %v377 = vmul.f32 %v376, %v28
    %v380 = vunpack.c.l.s4 1966171168
    %v381 = vunpack.c.0.s8 %v380
    %v382 = vlaneseq
    %v383 = vshrl.u32 %v382, 7
    %v384 = vsub.s32 %v381, %v383
    %v385 = vrot.slane %v377, %v384
    %v387 = vunpack.c.l.s4 1966171168
    %v388 = vunpack.c.0.s8 %v387
    %v389 = vlaneseq
    %v390 = vshrl.u32 %v389, 7
    %v391 = vsub.s32 %v388, %v390
    %v392 = vrot.slane %v385, %v391
    %v393 = vcombine.high %v392, %v392
    %v395 = vadd.f32 %v368, %v393
    %396 = vset.pattern.permute.xlu0 9
    %397 = vperm.xlu0 %396, %v322
    %v398 = vpop.permute.xlu0 %397
    %v400 = vmul.f32 %v398, %v29
    %v401 = vadd.f32 %v395, %v400
    %402 = vset.pattern.permute.xlu0 10
    %403 = vperm.xlu0 %402, %v322
    %v404 = vpop.permute.xlu0 %403
    %v406 = vmul.f32 %v404, %v286
    %v407 = vadd.f32 %v401, %v406
    %408 = vset.pattern.permute.xlu0 11
    %409 = vperm.xlu0 %408, %v322
    %v410 = vpop.permute.xlu0 %409
    %v412 = vmul.f32 %v410, %v294
    %v413 = vadd.f32 %v407, %v412
    %v414 = vtanh.pop %v413
    %v415 = vxor.u32 %v413, 2147483648
    %v416 = vmul.f32 %v415, 1.442695
    %v417 = vpow.pop %v416
    %v418 = vadd.f32 %v417, 1.0
    %v419 = vrcp.pop %v418
    %v420 = vmul.f32 1.0, %v419
    %v421 = vsel %vm35, %v414, %v420
    %v422 = vmul.f32 %v421, %v316
    %424 = vrot.lane.b32.xlu0 %v421, 122
    %v425 = vpop.permute.xlu0 %424
    %v427 = vmul.f32 %v421, %v425
    %429 = vrot.lane.b32.xlu0 %v427, 3
    %v430 = vpop.permute.xlu0 %429
    %v432 = vadd.f32 %v422, %v430
    %v433 = vtanh.pop %v432
    %435 = vrot.lane.b32.xlu0 %v433, 6
    %v436 = vpop.permute.xlu0 %435
    %v438 = vmul.f32 %v421, %v436
    %440 = vrot.lane.b32.xlu0 %v438, 119
    %v441 = vpop.permute.xlu0 %440
    %s443 = scalar_lea.vmem %s6, 2
    %444 = vst.msk [vmem:[%s443] sm:$0x1] %vm206, %v441
    %s445 = scalar_lea.vmem %s0, 3
    %v446 = vld [vmem:[%s445] sm:$0x1]
    %448 = vset.pattern.permute.xlu0 0
    %449 = vperm.xlu0 %448, %v446
    %v450 = vpop.permute.xlu0 %449
    %v452 = vlaneseq
    %v453 = vshrl.u32 %v452, 7
    %v454 = vsub.s32 0, %v453
    %v455 = vrot.slane %v450, %v454
    %v456 = vmul.f32 %v455, %v28
    %v457 = vadd.f32 %v30, %v456
    %458 = vset.pattern.permute.xlu0 1
    %459 = vperm.xlu0 %458, %v446
    %v460 = vpop.permute.xlu0 %459
    %v462 = vlaneseq
    %v463 = vshrl.u32 %v462, 7
    %v464 = vsub.s32 0, %v463
    %v465 = vrot.slane %v460, %v464
    %v466 = vmul.f32 %v465, %v28
    %v469 = vunpack.c.l.s4 1966171168
    %v470 = vunpack.c.0.s8 %v469
    %v471 = vlaneseq
    %v472 = vshrl.u32 %v471, 7
    %v473 = vsub.s32 %v470, %v472
    %v474 = vrot.slane %v466, %v473
    %v475 = vcombine.high %v474, %v474
    %v477 = vunpack.c.l.s4 1966171168
    %v478 = vunpack.c.0.s8 %v477
    %v479 = vlaneseq
    %v480 = vshrl.u32 %v479, 7
    %v481 = vsub.s32 %v478, %v480
    %v482 = vrot.slane %v475, %v481
    %v484 = vadd.f32 %v457, %v482
    %485 = vset.pattern.permute.xlu0 2
    %486 = vperm.xlu0 %485, %v446
    %v487 = vpop.permute.xlu0 %486
    %v489 = vlaneseq
    %v490 = vshrl.u32 %v489, 7
    %v491 = vsub.s32 0, %v490
    %v492 = vrot.slane %v487, %v491
    %v493 = vmul.f32 %v492, %v28
    %v496 = vunpack.c.l.s4 1966171168
    %v497 = vunpack.c.0.s8 %v496
    %v498 = vlaneseq
    %v499 = vshrl.u32 %v498, 7
    %v500 = vsub.s32 %v497, %v499
    %v501 = vrot.slane %v493, %v500
    %v503 = vunpack.c.l.s4 1966171168
    %v504 = vunpack.c.0.s8 %v503
    %v505 = vlaneseq
    %v506 = vshrl.u32 %v505, 7
    %v507 = vsub.s32 %v504, %v506
    %v508 = vrot.slane %v501, %v507
    %v509 = vcombine.high %v508, %v508
    %v511 = vadd.f32 %v484, %v509
    %512 = vset.pattern.permute.xlu0 9
    %513 = vperm.xlu0 %512, %v438
    %v514 = vpop.permute.xlu0 %513
    %v516 = vmul.f32 %v514, %v29
    %v517 = vadd.f32 %v511, %v516
    %518 = vset.pattern.permute.xlu0 10
    %519 = vperm.xlu0 %518, %v438
    %v520 = vpop.permute.xlu0 %519
    %v522 = vmul.f32 %v520, %v286
    %v523 = vadd.f32 %v517, %v522
    %524 = vset.pattern.permute.xlu0 11
    %525 = vperm.xlu0 %524, %v438
    %v526 = vpop.permute.xlu0 %525
    %v528 = vmul.f32 %v526, %v294
    %v529 = vadd.f32 %v523, %v528
    %v530 = vtanh.pop %v529
    %v531 = vxor.u32 %v529, 2147483648
    %v532 = vmul.f32 %v531, 1.442695
    %v533 = vpow.pop %v532
    %v534 = vadd.f32 %v533, 1.0
    %v535 = vrcp.pop %v534
    %v536 = vmul.f32 1.0, %v535
    %v537 = vsel %vm35, %v530, %v536
    %v538 = vmul.f32 %v537, %v432
    %540 = vrot.lane.b32.xlu0 %v537, 122
    %v541 = vpop.permute.xlu0 %540
    %v543 = vmul.f32 %v537, %v541
    %545 = vrot.lane.b32.xlu0 %v543, 3
    %v546 = vpop.permute.xlu0 %545
    %v548 = vadd.f32 %v538, %v546
    %v549 = vtanh.pop %v548
    %551 = vrot.lane.b32.xlu0 %v549, 6
    %v552 = vpop.permute.xlu0 %551
    %v554 = vmul.f32 %v537, %v552
    %556 = vrot.lane.b32.xlu0 %v554, 119
    %v557 = vpop.permute.xlu0 %556
    %s559 = scalar_lea.vmem %s6, 3
    %560 = vst.msk [vmem:[%s559] sm:$0x1] %vm206, %v557
    %s561 = scalar_lea.vmem %s0, 4
    %v562 = vld [vmem:[%s561] sm:$0x1]
    %564 = vset.pattern.permute.xlu0 0
    %565 = vperm.xlu0 %564, %v562
    %v566 = vpop.permute.xlu0 %565
    %v568 = vlaneseq
    %v569 = vshrl.u32 %v568, 7
    %v570 = vsub.s32 0, %v569
    %v571 = vrot.slane %v566, %v570
    %v572 = vmul.f32 %v571, %v28
    %v573 = vadd.f32 %v30, %v572
    %574 = vset.pattern.permute.xlu0 1
    %575 = vperm.xlu0 %574, %v562
    %v576 = vpop.permute.xlu0 %575
    %v578 = vlaneseq
    %v579 = vshrl.u32 %v578, 7
    %v580 = vsub.s32 0, %v579
    %v581 = vrot.slane %v576, %v580
    %v582 = vmul.f32 %v581, %v28
    %v585 = vunpack.c.l.s4 1966171168
    %v586 = vunpack.c.0.s8 %v585
    %v587 = vlaneseq
    %v588 = vshrl.u32 %v587, 7
    %v589 = vsub.s32 %v586, %v588
    %v590 = vrot.slane %v582, %v589
    %v591 = vcombine.high %v590, %v590
    %v593 = vunpack.c.l.s4 1966171168
    %v594 = vunpack.c.0.s8 %v593
    %v595 = vlaneseq
    %v596 = vshrl.u32 %v595, 7
    %v597 = vsub.s32 %v594, %v596
    %v598 = vrot.slane %v591, %v597
    %v600 = vadd.f32 %v573, %v598
    %601 = vset.pattern.permute.xlu0 2
    %602 = vperm.xlu0 %601, %v562
    %v603 = vpop.permute.xlu0 %602
    %v605 = vlaneseq
    %v606 = vshrl.u32 %v605, 7
    %v607 = vsub.s32 0, %v606
    %v608 = vrot.slane %v603, %v607
    %v609 = vmul.f32 %v608, %v28
    %v612 = vunpack.c.l.s4 1966171168
    %v613 = vunpack.c.0.s8 %v612
    %v614 = vlaneseq
    %v615 = vshrl.u32 %v614, 7
    %v616 = vsub.s32 %v613, %v615
    %v617 = vrot.slane %v609, %v616
    %v619 = vunpack.c.l.s4 1966171168
    %v620 = vunpack.c.0.s8 %v619
    %v621 = vlaneseq
    %v622 = vshrl.u32 %v621, 7
    %v623 = vsub.s32 %v620, %v622
    %v624 = vrot.slane %v617, %v623
    %v625 = vcombine.high %v624, %v624
    %v627 = vadd.f32 %v600, %v625
    %628 = vset.pattern.permute.xlu0 9
    %629 = vperm.xlu0 %628, %v554
    %v630 = vpop.permute.xlu0 %629
    %v632 = vmul.f32 %v630, %v29
    %v633 = vadd.f32 %v627, %v632
    %634 = vset.pattern.permute.xlu0 10
    %635 = vperm.xlu0 %634, %v554
    %v636 = vpop.permute.xlu0 %635
    %v638 = vmul.f32 %v636, %v286
    %v639 = vadd.f32 %v633, %v638
    %640 = vset.pattern.permute.xlu0 11
    %641 = vperm.xlu0 %640, %v554
    %v642 = vpop.permute.xlu0 %641
    %v644 = vmul.f32 %v642, %v294
    %v645 = vadd.f32 %v639, %v644
    %v646 = vtanh.pop %v645
    %v647 = vxor.u32 %v645, 2147483648
    %v648 = vmul.f32 %v647, 1.442695
    %v649 = vpow.pop %v648
    %v650 = vadd.f32 %v649, 1.0
    %v651 = vrcp.pop %v650
    %v652 = vmul.f32 1.0, %v651
    %v653 = vsel %vm35, %v646, %v652
    %v654 = vmul.f32 %v653, %v548
    %656 = vrot.lane.b32.xlu0 %v653, 122
    %v657 = vpop.permute.xlu0 %656
    %v659 = vmul.f32 %v653, %v657
    %661 = vrot.lane.b32.xlu0 %v659, 3
    %v662 = vpop.permute.xlu0 %661
    %v664 = vadd.f32 %v654, %v662
    %v665 = vtanh.pop %v664
    %667 = vrot.lane.b32.xlu0 %v665, 6
    %v668 = vpop.permute.xlu0 %667
    %v670 = vmul.f32 %v653, %v668
    %672 = vrot.lane.b32.xlu0 %v670, 119
    %v673 = vpop.permute.xlu0 %672
    %s675 = scalar_lea.vmem %s6, 4
    %676 = vst.msk [vmem:[%s675] sm:$0x1] %vm206, %v673
    %s677 = scalar_lea.vmem %s0, 5
    %v678 = vld [vmem:[%s677] sm:$0x1]
    %680 = vset.pattern.permute.xlu0 0
    %681 = vperm.xlu0 %680, %v678
    %v682 = vpop.permute.xlu0 %681
    %v684 = vlaneseq
    %v685 = vshrl.u32 %v684, 7
    %v686 = vsub.s32 0, %v685
    %v687 = vrot.slane %v682, %v686
    %v688 = vmul.f32 %v687, %v28
    %v689 = vadd.f32 %v30, %v688
    %690 = vset.pattern.permute.xlu0 1
    %691 = vperm.xlu0 %690, %v678
    %v692 = vpop.permute.xlu0 %691
    %v694 = vlaneseq
    %v695 = vshrl.u32 %v694, 7
    %v696 = vsub.s32 0, %v695
    %v697 = vrot.slane %v692, %v696
    %v698 = vmul.f32 %v697, %v28
    %v701 = vunpack.c.l.s4 1966171168
    %v702 = vunpack.c.0.s8 %v701
    %v703 = vlaneseq
    %v704 = vshrl.u32 %v703, 7
    %v705 = vsub.s32 %v702, %v704
    %v706 = vrot.slane %v698, %v705
    %v707 = vcombine.high %v706, %v706
    %v709 = vunpack.c.l.s4 1966171168
    %v710 = vunpack.c.0.s8 %v709
    %v711 = vlaneseq
    %v712 = vshrl.u32 %v711, 7
    %v713 = vsub.s32 %v710, %v712
    %v714 = vrot.slane %v707, %v713
    %v716 = vadd.f32 %v689, %v714
    %717 = vset.pattern.permute.xlu0 2
    %718 = vperm.xlu0 %717, %v678
    %v719 = vpop.permute.xlu0 %718
    %v721 = vlaneseq
    %v722 = vshrl.u32 %v721, 7
    %v723 = vsub.s32 0, %v722
    %v724 = vrot.slane %v719, %v723
    %v725 = vmul.f32 %v724, %v28
    %v728 = vunpack.c.l.s4 1966171168
    %v729 = vunpack.c.0.s8 %v728
    %v730 = vlaneseq
    %v731 = vshrl.u32 %v730, 7
    %v732 = vsub.s32 %v729, %v731
    %v733 = vrot.slane %v725, %v732
    %v735 = vunpack.c.l.s4 1966171168
    %v736 = vunpack.c.0.s8 %v735
    %v737 = vlaneseq
    %v738 = vshrl.u32 %v737, 7
    %v739 = vsub.s32 %v736, %v738
    %v740 = vrot.slane %v733, %v739
    %v741 = vcombine.high %v740, %v740
    %v743 = vadd.f32 %v716, %v741
    %744 = vset.pattern.permute.xlu0 9
    %745 = vperm.xlu0 %744, %v670
    %v746 = vpop.permute.xlu0 %745
    %v748 = vmul.f32 %v746, %v29
    %v749 = vadd.f32 %v743, %v748
    %750 = vset.pattern.permute.xlu0 10
    %751 = vperm.xlu0 %750, %v670
    %v752 = vpop.permute.xlu0 %751
    %v754 = vmul.f32 %v752, %v286
    %v755 = vadd.f32 %v749, %v754
    %756 = vset.pattern.permute.xlu0 11
    %757 = vperm.xlu0 %756, %v670
    %v758 = vpop.permute.xlu0 %757
    %v760 = vmul.f32 %v758, %v294
    %v761 = vadd.f32 %v755, %v760
    %v762 = vtanh.pop %v761
    %v763 = vxor.u32 %v761, 2147483648
    %v764 = vmul.f32 %v763, 1.442695
    %v765 = vpow.pop %v764
    %v766 = vadd.f32 %v765, 1.0
    %v767 = vrcp.pop %v766
    %v768 = vmul.f32 1.0, %v767
    %v769 = vsel %vm35, %v762, %v768
    %v770 = vmul.f32 %v769, %v664
    %772 = vrot.lane.b32.xlu0 %v769, 122
    %v773 = vpop.permute.xlu0 %772
    %v775 = vmul.f32 %v769, %v773
    %777 = vrot.lane.b32.xlu0 %v775, 3
    %v778 = vpop.permute.xlu0 %777
    %v780 = vadd.f32 %v770, %v778
    %v781 = vtanh.pop %v780
    %783 = vrot.lane.b32.xlu0 %v781, 6
    %v784 = vpop.permute.xlu0 %783
    %v786 = vmul.f32 %v769, %v784
    %788 = vrot.lane.b32.xlu0 %v786, 119
    %v789 = vpop.permute.xlu0 %788
    %s791 = scalar_lea.vmem %s6, 5
    %792 = vst.msk [vmem:[%s791] sm:$0x1] %vm206, %v789
    %s793 = scalar_lea.vmem %s0, 6
    %v794 = vld [vmem:[%s793] sm:$0x1]
    %796 = vset.pattern.permute.xlu0 0
    %797 = vperm.xlu0 %796, %v794
    %v798 = vpop.permute.xlu0 %797
    %v800 = vlaneseq
    %v801 = vshrl.u32 %v800, 7
    %v802 = vsub.s32 0, %v801
    %v803 = vrot.slane %v798, %v802
    %v804 = vmul.f32 %v803, %v28
    %v805 = vadd.f32 %v30, %v804
    %806 = vset.pattern.permute.xlu0 1
    %807 = vperm.xlu0 %806, %v794
    %v808 = vpop.permute.xlu0 %807
    %v810 = vlaneseq
    %v811 = vshrl.u32 %v810, 7
    %v812 = vsub.s32 0, %v811
    %v813 = vrot.slane %v808, %v812
    %v814 = vmul.f32 %v813, %v28
    %v817 = vunpack.c.l.s4 1966171168
    %v818 = vunpack.c.0.s8 %v817
    %v819 = vlaneseq
    %v820 = vshrl.u32 %v819, 7
    %v821 = vsub.s32 %v818, %v820
    %v822 = vrot.slane %v814, %v821
    %v823 = vcombine.high %v822, %v822
    %v825 = vunpack.c.l.s4 1966171168
    %v826 = vunpack.c.0.s8 %v825
    %v827 = vlaneseq
    %v828 = vshrl.u32 %v827, 7
    %v829 = vsub.s32 %v826, %v828
    %v830 = vrot.slane %v823, %v829
    %v832 = vadd.f32 %v805, %v830
    %833 = vset.pattern.permute.xlu0 2
    %834 = vperm.xlu0 %833, %v794
    %v835 = vpop.permute.xlu0 %834
    %v837 = vlaneseq
    %v838 = vshrl.u32 %v837, 7
    %v839 = vsub.s32 0, %v838
    %v840 = vrot.slane %v835, %v839
    %v841 = vmul.f32 %v840, %v28
    %v844 = vunpack.c.l.s4 1966171168
    %v845 = vunpack.c.0.s8 %v844
    %v846 = vlaneseq
    %v847 = vshrl.u32 %v846, 7
    %v848 = vsub.s32 %v845, %v847
    %v849 = vrot.slane %v841, %v848
    %v851 = vunpack.c.l.s4 1966171168
    %v852 = vunpack.c.0.s8 %v851
    %v853 = vlaneseq
    %v854 = vshrl.u32 %v853, 7
    %v855 = vsub.s32 %v852, %v854
    %v856 = vrot.slane %v849, %v855
    %v857 = vcombine.high %v856, %v856
    %v859 = vadd.f32 %v832, %v857
    %860 = vset.pattern.permute.xlu0 9
    %861 = vperm.xlu0 %860, %v786
    %v862 = vpop.permute.xlu0 %861
    %v864 = vmul.f32 %v862, %v29
    %v865 = vadd.f32 %v859, %v864
    %866 = vset.pattern.permute.xlu0 10
    %867 = vperm.xlu0 %866, %v786
    %v868 = vpop.permute.xlu0 %867
    %v870 = vmul.f32 %v868, %v286
    %v871 = vadd.f32 %v865, %v870
    %872 = vset.pattern.permute.xlu0 11
    %873 = vperm.xlu0 %872, %v786
    %v874 = vpop.permute.xlu0 %873
    %v876 = vmul.f32 %v874, %v294
    %v877 = vadd.f32 %v871, %v876
    %v878 = vtanh.pop %v877
    %v879 = vxor.u32 %v877, 2147483648
    %v880 = vmul.f32 %v879, 1.442695
    %v881 = vpow.pop %v880
    %v882 = vadd.f32 %v881, 1.0
    %v883 = vrcp.pop %v882
    %v884 = vmul.f32 1.0, %v883
    %v885 = vsel %vm35, %v878, %v884
    %v886 = vmul.f32 %v885, %v780
    %888 = vrot.lane.b32.xlu0 %v885, 122
    %v889 = vpop.permute.xlu0 %888
    %v891 = vmul.f32 %v885, %v889
    %893 = vrot.lane.b32.xlu0 %v891, 3
    %v894 = vpop.permute.xlu0 %893
    %v896 = vadd.f32 %v886, %v894
    %v897 = vtanh.pop %v896
    %899 = vrot.lane.b32.xlu0 %v897, 6
    %v900 = vpop.permute.xlu0 %899
    %v902 = vmul.f32 %v885, %v900
    %904 = vrot.lane.b32.xlu0 %v902, 119
    %v905 = vpop.permute.xlu0 %904
    %s907 = scalar_lea.vmem %s6, 6
    %908 = vst.msk [vmem:[%s907] sm:$0x1] %vm206, %v905
    %s909 = scalar_lea.vmem %s0, 7
    %v910 = vld [vmem:[%s909] sm:$0x1]
    %912 = vset.pattern.permute.xlu0 0
    %913 = vperm.xlu0 %912, %v910
    %v914 = vpop.permute.xlu0 %913
    %v916 = vlaneseq
    %v917 = vshrl.u32 %v916, 7
    %v918 = vsub.s32 0, %v917
    %v919 = vrot.slane %v914, %v918
    %v920 = vmul.f32 %v919, %v28
    %v921 = vadd.f32 %v30, %v920
    %922 = vset.pattern.permute.xlu0 1
    %923 = vperm.xlu0 %922, %v910
    %v924 = vpop.permute.xlu0 %923
    %v926 = vlaneseq
    %v927 = vshrl.u32 %v926, 7
    %v928 = vsub.s32 0, %v927
    %v929 = vrot.slane %v924, %v928
    %v930 = vmul.f32 %v929, %v28
    %v933 = vunpack.c.l.s4 1966171168
    %v934 = vunpack.c.0.s8 %v933
    %v935 = vlaneseq
    %v936 = vshrl.u32 %v935, 7
    %v937 = vsub.s32 %v934, %v936
    %v938 = vrot.slane %v930, %v937
    %v939 = vcombine.high %v938, %v938
    %v941 = vunpack.c.l.s4 1966171168
    %v942 = vunpack.c.0.s8 %v941
    %v943 = vlaneseq
    %v944 = vshrl.u32 %v943, 7
    %v945 = vsub.s32 %v942, %v944
    %v946 = vrot.slane %v939, %v945
    %v948 = vadd.f32 %v921, %v946
    %949 = vset.pattern.permute.xlu0 2
    %950 = vperm.xlu0 %949, %v910
    %v951 = vpop.permute.xlu0 %950
    %v953 = vlaneseq
    %v954 = vshrl.u32 %v953, 7
    %v955 = vsub.s32 0, %v954
    %v956 = vrot.slane %v951, %v955
    %v957 = vmul.f32 %v956, %v28
    %v960 = vunpack.c.l.s4 1966171168
    %v961 = vunpack.c.0.s8 %v960
    %v962 = vlaneseq
    %v963 = vshrl.u32 %v962, 7
    %v964 = vsub.s32 %v961, %v963
    %v965 = vrot.slane %v957, %v964
    %v967 = vunpack.c.l.s4 1966171168
    %v968 = vunpack.c.0.s8 %v967
    %v969 = vlaneseq
    %v970 = vshrl.u32 %v969, 7
    %v971 = vsub.s32 %v968, %v970
    %v972 = vrot.slane %v965, %v971
    %v973 = vcombine.high %v972, %v972
    %v975 = vadd.f32 %v948, %v973
    %976 = vset.pattern.permute.xlu0 9
    %977 = vperm.xlu0 %976, %v902
    %v978 = vpop.permute.xlu0 %977
    %v980 = vmul.f32 %v978, %v29
    %v981 = vadd.f32 %v975, %v980
    %982 = vset.pattern.permute.xlu0 10
    %983 = vperm.xlu0 %982, %v902
    %v984 = vpop.permute.xlu0 %983
    %v986 = vmul.f32 %v984, %v286
    %v987 = vadd.f32 %v981, %v986
    %988 = vset.pattern.permute.xlu0 11
    %989 = vperm.xlu0 %988, %v902
    %v990 = vpop.permute.xlu0 %989
    %v992 = vmul.f32 %v990, %v294
    %v993 = vadd.f32 %v987, %v992
    %v994 = vtanh.pop %v993
    %v995 = vxor.u32 %v993, 2147483648
    %v996 = vmul.f32 %v995, 1.442695
    %v997 = vpow.pop %v996
    %v998 = vadd.f32 %v997, 1.0
    %v999 = vrcp.pop %v998
    %v1000 = vmul.f32 1.0, %v999
    %v1001 = vsel %vm35, %v994, %v1000
    %v1002 = vmul.f32 %v1001, %v896
    %1004 = vrot.lane.b32.xlu0 %v1001, 122
    %v1005 = vpop.permute.xlu0 %1004
    %v1007 = vmul.f32 %v1001, %v1005
    %1009 = vrot.lane.b32.xlu0 %v1007, 3
    %v1010 = vpop.permute.xlu0 %1009
    %v1012 = vadd.f32 %v1002, %v1010
    %v1013 = vtanh.pop %v1012
    %1015 = vrot.lane.b32.xlu0 %v1013, 6
    %v1016 = vpop.permute.xlu0 %1015
    %v1018 = vmul.f32 %v1001, %v1016
    %1020 = vrot.lane.b32.xlu0 %v1018, 119
    %v1021 = vpop.permute.xlu0 %1020
    %s1023 = scalar_lea.vmem %s6, 7
    %1024 = vst.msk [vmem:[%s1023] sm:$0x1] %vm206, %v1021
    %1025 = vst.msk [vmem:[#allocation2] sm:$0x1] %vm206, %v1021
    %1027 = vrot.lane.b32.xlu0 %v1012, 125
    %v1028 = vpop.permute.xlu0 %1027
    %1030 = vst.msk [vmem:[#allocation4] sm:$0x1] %vm206, %v1028
    // Predicated region
    $region26: #{tpu_custom_call.1} parent=1 // pred_check
      _
    $region27: #{tpu_custom_call.1} parent=1 // pred_check_branch
      %1032 = sbr.rel (0) target = $region29
    $region28: #{tpu_custom_call.1} parent=1 // pred_region
      _
    $region29: #{tpu_custom_call.1} parent=1 // pred_fallthru
      _
    // Predicated region
    $region30: #{tpu_custom_call.1} parent=1 // pred_check
      _
    $region31: #{tpu_custom_call.1} parent=1 // pred_check_branch
      %1034 = sbr.rel (0) target = $region33
    $region32: #{tpu_custom_call.1} parent=1 // pred_region
      %s1036 = ssub.s32 16, 16
      %1037 = vsyncadd [#allocation3], %s1036
      %s1039 = sshll.u32 [#allocation2], 4
      %s1040 = int_to_ptr.vmem [resolvable:$true] %s1039
      %1042 = dma.vmem_to_hbm [thread:$0]  %s1040, 16, %s7, [#allocation3]
    $region33: #{tpu_custom_call.1} parent=1 // pred_fallthru
      _
    // Predicated region
    $region34: #{tpu_custom_call.1} parent=1 // pred_check
      _
    $region35: #{tpu_custom_call.1} parent=1 // pred_check_branch
      %1044 = sbr.rel (0) target = $region37
    $region36: #{tpu_custom_call.1} parent=1 // pred_region
      %s1046 = ssub.s32 16, 16
      %1047 = vsyncadd [#allocation5], %s1046
      %s1049 = sshll.u32 [#allocation4], 4
      %s1050 = int_to_ptr.vmem [resolvable:$true] %s1049
      %1052 = dma.vmem_to_hbm [thread:$0]  %s1050, 16, %s8, [#allocation5]
    $region37: #{tpu_custom_call.1} parent=1 // pred_fallthru
      _
    // Predicated region
    $region38: #{tpu_custom_call.1} parent=1 // pred_check
      _
    $region39: #{tpu_custom_call.1} parent=1 // pred_check_branch
      %1054 = sbr.rel (0) target = $region41
    $region40: #{tpu_custom_call.1} parent=1 // pred_region
      _
    $region41: #{tpu_custom_call.1} parent=1 // pred_fallthru
      _
    // Predicated region
    $region42: #{tpu_custom_call.1} parent=1 // pred_check
      _
    $region43: #{tpu_custom_call.1} parent=1 // pred_check_branch
      %1056 = sbr.rel (0) target = $region45
    $region44: #{tpu_custom_call.1} parent=1 // pred_region
      %1057 = dma.done [#allocation3], 16
    $region45: #{tpu_custom_call.1} parent=1 // pred_fallthru
      _
    // Predicated region
    $region46: #{tpu_custom_call.1} parent=1 // pred_check
      _
    $region47: #{tpu_custom_call.1} parent=1 // pred_check_branch
      %1059 = sbr.rel (0) target = $region49
    $region48: #{tpu_custom_call.1} parent=1 // pred_region
      %1060 = dma.done [#allocation5], 16
    $region49: #{tpu_custom_call.1} parent=1 // pred_fallthru
      _
    %1061 = vsyncpa [#allocation3], 1
    %1062 = vsyncpa [#allocation5], 1

</llo_original>
